<compile_context>
chip_gen: v7x
topology: tpu7x:2x2x1
jax: 0.10.0
libtpu: 0.0.40
codegen_flags: <defaults>
</compile_context>

<pallas_src>
import functools
import math

import jax
import jax.numpy as jnp
import numpy as np
from jax.experimental import pallas as pl
from jax.experimental.pallas import tpu as pltpu

_MIB = 1024 * 1024


def _vmem_cap_bytes():
    try:
        return int(pltpu.get_tpu_info().vmem_capacity_bytes)
    except Exception:
        return 64 * _MIB  # conservative (v7x-sized) default if the query is unavailable


def _pick_block(total, target):
    """Largest tile <= target that divides `total` (prefer multiples of 8)."""
    if total <= target:
        return total
    for cand in range(target, 0, -1):
        if total % cand == 0 and cand % 8 == 0:
            return cand
    return total


def _layernorm_f32(v, w, b, eps=1e-5):
    v = v.astype(jnp.float32)
    mu = jnp.mean(v, axis=-1, keepdims=True)
    var = jnp.mean(jnp.square(v - mu), axis=-1, keepdims=True)
    return (v - mu) * jax.lax.rsqrt(var + eps) * w + b


# ----------------------------------------------------------------------------- stage 1
def qkv_proj_kernel(x_ref, ln1w_ref, ln1b_ref,
                    wq_ref, bq_ref, wk_ref, bk_ref, wv_ref, bv_ref,
                    q_ref, k_ref, v_ref, *, num_heads):
    """LN1 + Q/K/V projections, computed once per token, written head-major (H, rows, D)."""
    xn = _layernorm_f32(x_ref[0], ln1w_ref[...], ln1b_ref[...]).astype(jnp.bfloat16)
    # Weights are pre-shaped (H, E, D); biases (H, 1, D).  Static unroll over heads keeps
    # outputs head-major without any activation transpose.  1/sqrt(D) already in wq/bq.
    for h in range(num_heads):
        q_ref[0, h] = (jnp.dot(xn, wq_ref[h], preferred_element_type=jnp.float32)
                       + bq_ref[h]).astype(jnp.bfloat16)
        k_ref[0, h] = (jnp.dot(xn, wk_ref[h], preferred_element_type=jnp.float32)
                       + bk_ref[h]).astype(jnp.bfloat16)
        v_ref[0, h] = (jnp.dot(xn, wv_ref[h], preferred_element_type=jnp.float32)
                       + bv_ref[h]).astype(jnp.bfloat16)


# ----------------------------------------------------------------------------- stage 2
def attn_ffn_kernel(x_ref, q_ref, k_ref, v_ref,
                    wo_ref, bo_ref, ln2w_ref, ln2b_ref,
                    w1_ref, b1_ref, w2_ref, b2_ref,
                    o_ref,
                    m_scr, l_scr, acc_scr, *, num_heads):
    """Flash-style attention over kv blocks + out-proj + residual + LN2 + FFN + residual."""
    kv = pl.program_id(2)

    @pl.when(kv == 0)
    def _():
        m_scr[...] = jnp.full(m_scr.shape, -jnp.inf, m_scr.dtype)
        l_scr[...] = jnp.zeros(l_scr.shape, l_scr.dtype)
        acc_scr[...] = jnp.zeros(acc_scr.shape, acc_scr.dtype)

    qh = q_ref[0]   # (H, block_q, D) bf16, scale already folded into the Q weights
    kh = k_ref[0]   # (H, block_k, D) bf16
    vh = v_ref[0]   # (H, block_k, D) bf16

    # TODO(synk): attn_mask is not supported (mask=None path only).
    s = jnp.einsum("hqd,hkd->hqk", qh, kh, preferred_element_type=jnp.float32)
    m_prev = m_scr[...]
    m_new = jnp.maximum(m_prev, jnp.max(s, axis=-1, keepdims=True))
    alpha = jnp.exp(m_prev - m_new)
    p = jnp.exp(s - m_new)
    l_scr[...] = alpha * l_scr[...] + jnp.sum(p, axis=-1, keepdims=True)
    acc_scr[...] = alpha * acc_scr[...] + jnp.einsum(
        "hqk,hkd->hqd", p.astype(jnp.bfloat16), vh, preferred_element_type=jnp.float32)
    m_scr[...] = m_new

    @pl.when(kv == pl.num_programs(2) - 1)
    def _():
        inv_l = pl.reciprocal(l_scr[...], approx=True)
        ctx = (acc_scr[...] * inv_l).astype(jnp.bfloat16)        # (H, block_q, D)

        x = x_ref[0].astype(jnp.float32)                          # (block_q, E) residual rows
        tq, e = x.shape

        # Output projection: accumulate per head against wo pre-shaped (H, D, E)
        # (avoids the (H,q,D)->(q,H*D) transpose+reshape in the hot path).
        attn = jnp.zeros((tq, e), jnp.float32)
        for h in range(num_heads):
            attn = attn + jnp.dot(ctx[h], wo_ref[h], preferred_element_type=jnp.float32)
        attn = attn + bo_ref[...]

        # residual; dropout is identity in eval mode
        # TODO(synk): training-mode dropout (p=0.2) not implemented.
        x1 = x + attn

        # norm2 + feed-forward (bf16 matmuls, f32 statistics/accumulation)
        x1n = _layernorm_f32(x1, ln2w_ref[...], ln2b_ref[...]).astype(jnp.bfloat16)
        h1 = jnp.dot(x1n, w1_ref[...], preferred_element_type=jnp.float32) + b1_ref[...]
        h1 = jnp.maximum(h1, 0.0).astype(jnp.bfloat16)
        ff = jnp.dot(h1, w2_ref[...], preferred_element_type=jnp.float32) + b2_ref[...]

        o_ref[0] = (x1 + ff).astype(o_ref.dtype)


# ----------------------------------------------------------------------------- wrapper
def prepare_params(params, *, embedding_dim, num_heads):
    """One-time parameter prep: bf16 casts, per-head weight splits, 1/sqrt(D) folding.

    Hoisted out of the forward wrapper so no per-call HBM traffic is spent re-casting.
    """
    (ln1w, ln1b, wq, bq, wk, bk, wv, bv, wo, bo,
     ln2w, ln2b, w1, b1, w2, b2) = params
    E, H = embedding_dim, num_heads
    D = E // H
    scale = 1.0 / math.sqrt(D)

    def head_w(w, s=1.0):   # (E, E) -> (H, E, D) bf16
        return jnp.transpose((w * s).reshape(E, H, D), (1, 0, 2)).astype(jnp.bfloat16)

    def head_b(b, s=1.0):   # (1, E) -> (H, 1, D) f32
        return jnp.transpose((b * s).reshape(1, H, D), (1, 0, 2)).astype(jnp.float32)

    return dict(
        ln1w=ln1w.astype(jnp.float32), ln1b=ln1b.astype(jnp.float32),
        wq=head_w(wq, scale), bq=head_b(bq, scale),
        wk=head_w(wk), bk=head_b(bk),
        wv=head_w(wv), bv=head_b(bv),
        wo=wo.reshape(H, D, E).astype(jnp.bfloat16), bo=bo.astype(jnp.float32),
        ln2w=ln2w.astype(jnp.float32), ln2b=ln2b.astype(jnp.float32),
        w1=w1.astype(jnp.bfloat16), b1=b1.astype(jnp.float32),
        w2=w2.astype(jnp.bfloat16), b2=b2.astype(jnp.float32),
    )


def _full_spec(arr):
    nd = arr.ndim
    return pl.BlockSpec(arr.shape, lambda *_: (0,) * nd)


def attention_block(x, prep, *, embedding_dim, num_heads,
                    block_q=None, block_k=None, block_s=None):
    B, S, E = x.shape
    assert E == embedding_dim
    H = num_heads
    D = E // H
    assert H * D == E

    cap = _vmem_cap_bytes()
    vmem_ceiling = int(cap * 0.8)          # ~51 MiB on v7x, ~102 MiB on v5e/v6e
    small_vmem = cap <= 64 * _MIB

    if block_q is None:
        block_q = _pick_block(S, 256 if small_vmem else 512)
    if block_k is None:
        block_k = _pick_block(S, 512)
    if block_s is None:
        block_s = _pick_block(S, 512)
    assert S % block_q == 0 and S % block_k == 0 and S % block_s == 0
    n_q, n_kv, n_s = S // block_q, S // block_k, S // block_s

    bf16, f32 = 2, 4
    Dp = max(D, 128)        # minor-dim lane padding for head-major (..., D) buffers
    E4 = 4 * E

    # ---- stage 1: LN1 + QKV projections (once per token) ----
    est_a = (
        2 * block_s * E * f32                              # x tile (double-buffered)
        + 2 * 3 * H * block_s * Dp * bf16                  # q/k/v out tiles
        + 2 * 3 * (H * E * D * bf16 + H * Dp * f32)        # head-split weights + biases
        + 4 * E * f32                                      # LN1 params
        + block_s * E * (f32 + bf16)                       # xn (f32 stats + bf16 copy)
        + 3 * block_s * Dp * f32                           # per-head f32 accumulators
    )
    vmem_a = int(min(max(int(est_a * 1.25), 16 * _MIB), vmem_ceiling))

    qh, kh, vh = pl.pallas_call(
        functools.partial(qkv_proj_kernel, num_heads=H),
        out_shape=(jax.ShapeDtypeStruct((B, H, S, D), jnp.bfloat16),
                   jax.ShapeDtypeStruct((B, H, S, D), jnp.bfloat16),
                   jax.ShapeDtypeStruct((B, H, S, D), jnp.bfloat16)),
        grid_spec=pltpu.PrefetchScalarGridSpec(
            num_scalar_prefetch=0,
            grid=(B, n_s),
            in_specs=[
                pl.BlockSpec((1, block_s, E), lambda b, s: (b, s, 0)),
                _full_spec(prep["ln1w"]), _full_spec(prep["ln1b"]),
                _full_spec(prep["wq"]), _full_spec(prep["bq"]),
                _full_spec(prep["wk"]), _full_spec(prep["bk"]),
                _full_spec(prep["wv"]), _full_spec(prep["bv"]),
            ],
            out_specs=[pl.BlockSpec((1, H, block_s, D), lambda b, s: (b, 0, s, 0))] * 3,
        ),
        compiler_params=pltpu.CompilerParams(
            dimension_semantics=("parallel", "parallel"),
            vmem_limit_bytes=vmem_a,
        ),
    )(x, prep["ln1w"], prep["ln1b"],
      prep["wq"], prep["bq"], prep["wk"], prep["bk"], prep["wv"], prep["bv"])

    # ---- stage 2: flash attention + out-proj + residual + LN2 + FFN ----
    # TODO(synk): constant-index weight specs are conservatively budgeted as double-buffered;
    # pipeline_mode=pl.Buffered(1) on those specs would halve their VMEM footprint.
    est_b = (
        2 * 2 * block_q * E * f32                          # x tile + out tile
        + 2 * H * block_q * Dp * bf16                      # q tile
        + 2 * 2 * H * block_k * Dp * bf16                  # k/v tiles
        + 2 * 9 * E * E * bf16                             # wo + w1 + w2 (double-buffered)
        + 10 * E * f32                                     # biases + LN2 params
        + (2 * 128 + Dp) * H * block_q * f32               # m/l/acc scratch (lane-padded)
        + 3 * H * block_q * block_k * f32                  # s / p live copies
        + block_q * E4 * (f32 + bf16)                      # FFN hidden
        + 3 * block_q * E * f32                            # x1 / attn / ff intermediates
    )
    vmem_b = int(min(max(int(est_b * 1.25), 16 * _MIB), vmem_ceiling))

    out = pl.pallas_call(
        functools.partial(attn_ffn_kernel, num_heads=H),
        out_shape=jax.ShapeDtypeStruct((B, S, E), x.dtype),
        grid_spec=pltpu.PrefetchScalarGridSpec(
            num_scalar_prefetch=0,
            grid=(B, n_q, n_kv),
            in_specs=[
                pl.BlockSpec((1, block_q, E), lambda b, q, k: (b, q, 0)),       # residual rows
                pl.BlockSpec((1, H, block_q, D), lambda b, q, k: (b, 0, q, 0)),  # Q tile
                pl.BlockSpec((1, H, block_k, D), lambda b, q, k: (b, 0, k, 0)),  # K tile
                pl.BlockSpec((1, H, block_k, D), lambda b, q, k: (b, 0, k, 0)),  # V tile
                _full_spec(prep["wo"]), _full_spec(prep["bo"]),
                _full_spec(prep["ln2w"]), _full_spec(prep["ln2b"]),
                _full_spec(prep["w1"]), _full_spec(prep["b1"]),
                _full_spec(prep["w2"]), _full_spec(prep["b2"]),
            ],
            out_specs=pl.BlockSpec((1, block_q, E), lambda b, q, k: (b, q, 0)),
            scratch_shapes=[
                pltpu.VMEM((H, block_q, 1), jnp.float32),   # running max
                pltpu.VMEM((H, block_q, 1), jnp.float32),   # running denominator
                pltpu.VMEM((H, block_q, D), jnp.float32),   # running weighted-value accumulator
            ],
        ),
        compiler_params=pltpu.CompilerParams(
            dimension_semantics=("parallel", "parallel", "arbitrary"),
            vmem_limit_bytes=vmem_b,
        ),
    )(x, qh, kh, vh,
      prep["wo"], prep["bo"], prep["ln2w"], prep["ln2b"],
      prep["w1"], prep["b1"], prep["w2"], prep["b2"])
    return out


# ----------------------------------------------------------------------------- params / ref
def init_params(key, embedding_dim):
    E = embedding_dim
    ks = jax.random.split(key, 12)
    s = 0.02
    # LayerNorm params (PyTorch default: weight=1, bias=0)
    ln1w = jnp.ones((1, E), jnp.float32)
    ln1b = jnp.zeros((1, E), jnp.float32)
    ln2w = jnp.ones((1, E), jnp.float32)
    ln2b = jnp.zeros((1, E), jnp.float32)
    # MHA in_proj split into q/k/v, stored transposed (in, out); out_proj transposed.
    wq = s * jax.random.normal(ks[0], (E, E), jnp.float32)
    bq = s * jax.random.normal(ks[1], (1, E), jnp.float32)
    wk = s * jax.random.normal(ks[2], (E, E), jnp.float32)
    bk = s * jax.random.normal(ks[3], (1, E), jnp.float32)
    wv = s * jax.random.normal(ks[4], (E, E), jnp.float32)
    bv = s * jax.random.normal(ks[5], (1, E), jnp.float32)
    wo = s * jax.random.normal(ks[6], (E, E), jnp.float32)
    bo = s * jax.random.normal(ks[7], (1, E), jnp.float32)
    # feed-forward: Linear(E, 4E) and Linear(4E, E), stored transposed (in, out).
    w1 = s * jax.random.normal(ks[8], (E, 4 * E), jnp.float32)
    b1 = s * jax.random.normal(ks[9], (1, 4 * E), jnp.float32)
    w2 = s * jax.random.normal(ks[10], (4 * E, E), jnp.float32)
    b2 = s * jax.random.normal(ks[11], (1, E), jnp.float32)
    return (ln1w, ln1b, wq, bq, wk, bk, wv, bv, wo, bo, ln2w, ln2b, w1, b1, w2, b2)


def reference_block(x, params, *, embedding_dim, num_heads):
    """Pure-JAX f32 reference reproducing the PyTorch forward (eval mode, mask=None)."""
    (ln1w, ln1b, wq, bq, wk, bk, wv, bv, wo, bo,
     ln2w, ln2b, w1, b1, w2, b2) = params
    E, H = embedding_dim, num_heads
    D = E // H
    B, S, _ = x.shape

    def ln(v, w, b):
        mu = jnp.mean(v, axis=-1, keepdims=True)
        var = jnp.mean((v - mu) ** 2, axis=-1, keepdims=True)
        return (v - mu) / jnp.sqrt(var + 1e-5) * w[0] + b[0]

    xn = ln(x, ln1w, ln1b)
    q = (xn @ wq + bq[0]) / math.sqrt(D)
    k = xn @ wk + bk[0]
    v = xn @ wv + bv[0]
    q = q.reshape(B, S, H, D).transpose(0, 2, 1, 3)
    k = k.reshape(B, S, H, D).transpose(0, 2, 1, 3)
    v = v.reshape(B, S, H, D).transpose(0, 2, 1, 3)
    p = jax.nn.softmax(jnp.einsum("bhqd,bhkd->bhqk", q, k), axis=-1)
    attn = jnp.einsum("bhqk,bhkd->bhqd", p, v).transpose(0, 2, 1, 3).reshape(B, S, E)
    attn = attn @ wo + bo[0]
    x1 = x + attn
    xn2 = ln(x1, ln2w, ln2b)
    ff = jnp.maximum(xn2 @ w1 + b1[0], 0.0) @ w2 + b2[0]
    return x1 + ff


if __name__ == "__main__":
    B, S, E, H = 2, 8, 32, 4

    key = jax.random.PRNGKey(0)
    kx, kp = jax.random.split(key)
    x = jax.random.normal(kx, (B, S, E), jnp.float32)
    params = init_params(kp, E)

    prep = prepare_params(params, embedding_dim=E, num_heads=H)   # one-time weight prep
    out = attention_block(x, prep, embedding_dim=E, num_heads=H)
    out = jax.block_until_ready(out)

    ref = jax.block_until_ready(reference_block(x, params, embedding_dim=E, num_heads=H))
    # bf16 matmul operands + approx reciprocal -> loosen tolerance vs the f32 reference.
    np.testing.assert_allclose(np.asarray(out), np.asarray(ref), rtol=2e-2, atol=2e-2)

    print("KERNEL_OK")
</pallas_src>

<mosaic_0001>
module attributes {stable_mosaic.version = 11 : i64} {
  func.func @qkv_proj_kernel(%arg0: i32, %arg1: i32, %arg2: memref<1x8x32xf32, #tpu.memory_space<vmem>>, %arg3: memref<1x32xf32, #tpu.memory_space<vmem>>, %arg4: memref<1x32xf32, #tpu.memory_space<vmem>>, %arg5: memref<4x32x8xbf16, #tpu.memory_space<vmem>>, %arg6: memref<4x1x8xf32, #tpu.memory_space<vmem>>, %arg7: memref<4x32x8xbf16, #tpu.memory_space<vmem>>, %arg8: memref<4x1x8xf32, #tpu.memory_space<vmem>>, %arg9: memref<4x32x8xbf16, #tpu.memory_space<vmem>>, %arg10: memref<4x1x8xf32, #tpu.memory_space<vmem>>, %arg11: memref<1x4x8x8xbf16, #tpu.memory_space<vmem>>, %arg12: memref<1x4x8x8xbf16, #tpu.memory_space<vmem>>, %arg13: memref<1x4x8x8xbf16, #tpu.memory_space<vmem>>) attributes {dimension_semantics = [#tpu.dimension_semantics<parallel>, #tpu.dimension_semantics<parallel>], iteration_bounds = array<i64: 2, 1>, scalar_prefetch = 0 : i64, scratch_operands = 0 : i64, tpu.core_type = #tpu.core_type<tc>, window_params = [{transform_indices = @transform_0, window_bounds = array<i64: 1, 8, 32>}, {pipeline_mode = #tpu.pipeline_mode<synchronous>, transform_indices = @transform_1, window_bounds = array<i64: 1, 32>}, {pipeline_mode = #tpu.pipeline_mode<synchronous>, transform_indices = @transform_2, window_bounds = array<i64: 1, 32>}, {pipeline_mode = #tpu.pipeline_mode<synchronous>, transform_indices = @transform_3, window_bounds = array<i64: 4, 32, 8>}, {pipeline_mode = #tpu.pipeline_mode<synchronous>, transform_indices = @transform_4, window_bounds = array<i64: 4, 1, 8>}, {pipeline_mode = #tpu.pipeline_mode<synchronous>, transform_indices = @transform_5, window_bounds = array<i64: 4, 32, 8>}, {pipeline_mode = #tpu.pipeline_mode<synchronous>, transform_indices = @transform_6, window_bounds = array<i64: 4, 1, 8>}, {pipeline_mode = #tpu.pipeline_mode<synchronous>, transform_indices = @transform_7, window_bounds = array<i64: 4, 32, 8>}, {pipeline_mode = #tpu.pipeline_mode<synchronous>, transform_indices = @transform_8, window_bounds = array<i64: 4, 1, 8>}, {transform_indices = @transform_9, window_bounds = array<i64: 1, 4, 8, 8>}, {transform_indices = @transform_10, window_bounds = array<i64: 1, 4, 8, 8>}, {transform_indices = @transform_11, window_bounds = array<i64: 1, 4, 8, 8>}]} {
    %c0 = arith.constant 0 : index
    %c0_0 = arith.constant 0 : index
    %c0_1 = arith.constant 0 : index
    %0 = vector.load %arg2[%c0, %c0_0, %c0_1] : memref<1x8x32xf32, #tpu.memory_space<vmem>>, vector<1x8x32xf32>
    %1 = vector.shape_cast %0 : vector<1x8x32xf32> to vector<8x32xf32>
    %c0_2 = arith.constant 0 : index
    %c0_3 = arith.constant 0 : index
    %2 = vector.load %arg3[%c0_2, %c0_3] : memref<1x32xf32, #tpu.memory_space<vmem>>, vector<1x32xf32>
    %c0_4 = arith.constant 0 : index
    %c0_5 = arith.constant 0 : index
    %3 = vector.load %arg4[%c0_4, %c0_5] : memref<1x32xf32, #tpu.memory_space<vmem>>, vector<1x32xf32>
    %cst = arith.constant dense<0.000000e+00> : vector<8xf32>
    %4 = vector.multi_reduction <add>, %1, %cst [1] : vector<8x32xf32> to vector<8xf32>
    %5 = vector.shape_cast %4 : vector<8xf32> to vector<8x1xf32>
    %cst_6 = arith.constant 3.200000e+01 : f32
    %6 = vector.broadcast %cst_6 : f32 to vector<8x1xf32>
    %7 = arith.divf %5, %6 : vector<8x1xf32>
    %8 = vector.broadcast %7 : vector<8x1xf32> to vector<8x32xf32>
    %9 = arith.subf %1, %8 : vector<8x32xf32>
    %10 = arith.mulf %9, %9 : vector<8x32xf32>
    %cst_7 = arith.constant dense<0.000000e+00> : vector<8xf32>
    %11 = vector.multi_reduction <add>, %10, %cst_7 [1] : vector<8x32xf32> to vector<8xf32>
    %12 = vector.shape_cast %11 : vector<8xf32> to vector<8x1xf32>
    %cst_8 = arith.constant 3.200000e+01 : f32
    %13 = vector.broadcast %cst_8 : f32 to vector<8x1xf32>
    %14 = arith.divf %12, %13 : vector<8x1xf32>
    %15 = vector.broadcast %7 : vector<8x1xf32> to vector<8x32xf32>
    %16 = arith.subf %1, %15 : vector<8x32xf32>
    %cst_9 = arith.constant 9.99999974E-6 : f32
    %17 = vector.broadcast %cst_9 : f32 to vector<8x1xf32>
    %18 = arith.addf %14, %17 : vector<8x1xf32>
    %19 = math.rsqrt %18 : vector<8x1xf32>
    %20 = vector.broadcast %19 : vector<8x1xf32> to vector<8x32xf32>
    %21 = arith.mulf %16, %20 : vector<8x32xf32>
    %22 = vector.broadcast %2 : vector<1x32xf32> to vector<8x32xf32>
    %23 = arith.mulf %21, %22 : vector<8x32xf32>
    %24 = vector.broadcast %3 : vector<1x32xf32> to vector<8x32xf32>
    %25 = arith.addf %23, %24 : vector<8x32xf32>
    %26 = arith.truncf %25 : vector<8x32xf32> to vector<8x32xbf16>
    %c0_10 = arith.constant 0 : index
    %c0_11 = arith.constant 0 : index
    %c0_12 = arith.constant 0 : index
    %27 = vector.load %arg5[%c0_10, %c0_11, %c0_12] : memref<4x32x8xbf16, #tpu.memory_space<vmem>>, vector<1x32x8xbf16>
    %28 = vector.shape_cast %27 : vector<1x32x8xbf16> to vector<32x8xbf16>
    %cst_13 = arith.constant dense<0.000000e+00> : vector<8x8xf32>
    %29 = tpu.matmul %26, %28, %cst_13 {dimension_numbers = #tpu.dot_dimension_numbers<[1], [0], [0], [1], [0, 0, 1, 1], [], []>} : vector<8x32xbf16>, vector<32x8xbf16>, vector<8x8xf32> -> vector<8x8xf32>
    %c0_14 = arith.constant 0 : index
    %c0_15 = arith.constant 0 : index
    %c0_16 = arith.constant 0 : index
    %30 = vector.load %arg6[%c0_14, %c0_15, %c0_16] : memref<4x1x8xf32, #tpu.memory_space<vmem>>, vector<1x1x8xf32>
    %31 = vector.shape_cast %30 : vector<1x1x8xf32> to vector<1x8xf32>
    %32 = vector.broadcast %31 : vector<1x8xf32> to vector<8x8xf32>
    %33 = arith.addf %29, %32 : vector<8x8xf32>
    %34 = arith.truncf %33 : vector<8x8xf32> to vector<8x8xbf16>
    %c0_17 = arith.constant 0 : index
    %c0_18 = arith.constant 0 : index
    %c0_19 = arith.constant 0 : index
    %c0_20 = arith.constant 0 : index
    %35 = vector.load %arg11[%c0_17, %c0_18, %c0_19, %c0_20] : memref<1x4x8x8xbf16, #tpu.memory_space<vmem>>, vector<1x1x8x8xbf16>
    %36 = vector.shape_cast %35 : vector<1x1x8x8xbf16> to vector<8x8xbf16>
    %37 = vector.shape_cast %34 : vector<8x8xbf16> to vector<1x1x8x8xbf16>
    tpu.vector_store %arg11[%c0_17, %c0_18, %c0_19, %c0_20], %37 {strides = array<i32>} : memref<1x4x8x8xbf16, #tpu.memory_space<vmem>>, vector<1x1x8x8xbf16>,
    %c0_21 = arith.constant 0 : index
    %c0_22 = arith.constant 0 : index
    %c0_23 = arith.constant 0 : index
    %38 = vector.load %arg7[%c0_21, %c0_22, %c0_23] : memref<4x32x8xbf16, #tpu.memory_space<vmem>>, vector<1x32x8xbf16>
    %39 = vector.shape_cast %38 : vector<1x32x8xbf16> to vector<32x8xbf16>
    %cst_24 = arith.constant dense<0.000000e+00> : vector<8x8xf32>
    %40 = tpu.matmul %26, %39, %cst_24 {dimension_numbers = #tpu.dot_dimension_numbers<[1], [0], [0], [1], [0, 0, 1, 1], [], []>} : vector<8x32xbf16>, vector<32x8xbf16>, vector<8x8xf32> -> vector<8x8xf32>
    %c0_25 = arith.constant 0 : index
    %c0_26 = arith.constant 0 : index
    %c0_27 = arith.constant 0 : index
    %41 = vector.load %arg8[%c0_25, %c0_26, %c0_27] : memref<4x1x8xf32, #tpu.memory_space<vmem>>, vector<1x1x8xf32>
    %42 = vector.shape_cast %41 : vector<1x1x8xf32> to vector<1x8xf32>
    %43 = vector.broadcast %42 : vector<1x8xf32> to vector<8x8xf32>
    %44 = arith.addf %40, %43 : vector<8x8xf32>
    %45 = arith.truncf %44 : vector<8x8xf32> to vector<8x8xbf16>
    %c0_28 = arith.constant 0 : index
    %c0_29 = arith.constant 0 : index
    %c0_30 = arith.constant 0 : index
    %c0_31 = arith.constant 0 : index
    %46 = vector.load %arg12[%c0_28, %c0_29, %c0_30, %c0_31] : memref<1x4x8x8xbf16, #tpu.memory_space<vmem>>, vector<1x1x8x8xbf16>
    %47 = vector.shape_cast %46 : vector<1x1x8x8xbf16> to vector<8x8xbf16>
    %48 = vector.shape_cast %45 : vector<8x8xbf16> to vector<1x1x8x8xbf16>
    tpu.vector_store %arg12[%c0_28, %c0_29, %c0_30, %c0_31], %48 {strides = array<i32>} : memref<1x4x8x8xbf16, #tpu.memory_space<vmem>>, vector<1x1x8x8xbf16>,
    %c0_32 = arith.constant 0 : index
    %c0_33 = arith.constant 0 : index
    %c0_34 = arith.constant 0 : index
    %49 = vector.load %arg9[%c0_32, %c0_33, %c0_34] : memref<4x32x8xbf16, #tpu.memory_space<vmem>>, vector<1x32x8xbf16>
    %50 = vector.shape_cast %49 : vector<1x32x8xbf16> to vector<32x8xbf16>
    %cst_35 = arith.constant dense<0.000000e+00> : vector<8x8xf32>
    %51 = tpu.matmul %26, %50, %cst_35 {dimension_numbers = #tpu.dot_dimension_numbers<[1], [0], [0], [1], [0, 0, 1, 1], [], []>} : vector<8x32xbf16>, vector<32x8xbf16>, vector<8x8xf32> -> vector<8x8xf32>
    %c0_36 = arith.constant 0 : index
    %c0_37 = arith.constant 0 : index
    %c0_38 = arith.constant 0 : index
    %52 = vector.load %arg10[%c0_36, %c0_37, %c0_38] : memref<4x1x8xf32, #tpu.memory_space<vmem>>, vector<1x1x8xf32>
    %53 = vector.shape_cast %52 : vector<1x1x8xf32> to vector<1x8xf32>
    %54 = vector.broadcast %53 : vector<1x8xf32> to vector<8x8xf32>
    %55 = arith.addf %51, %54 : vector<8x8xf32>
    %56 = arith.truncf %55 : vector<8x8xf32> to vector<8x8xbf16>
    %c0_39 = arith.constant 0 : index
    %c0_40 = arith.constant 0 : index
    %c0_41 = arith.constant 0 : index
    %c0_42 = arith.constant 0 : index
    %57 = vector.load %arg13[%c0_39, %c0_40, %c0_41, %c0_42] : memref<1x4x8x8xbf16, #tpu.memory_space<vmem>>, vector<1x1x8x8xbf16>
    %58 = vector.shape_cast %57 : vector<1x1x8x8xbf16> to vector<8x8xbf16>
    %59 = vector.shape_cast %56 : vector<8x8xbf16> to vector<1x1x8x8xbf16>
    tpu.vector_store %arg13[%c0_39, %c0_40, %c0_41, %c0_42], %59 {strides = array<i32>} : memref<1x4x8x8xbf16, #tpu.memory_space<vmem>>, vector<1x1x8x8xbf16>,
    %c1 = arith.constant 1 : index
    %c0_43 = arith.constant 0 : index
    %c0_44 = arith.constant 0 : index
    %60 = vector.load %arg5[%c1, %c0_43, %c0_44] : memref<4x32x8xbf16, #tpu.memory_space<vmem>>, vector<1x32x8xbf16>
    %61 = vector.shape_cast %60 : vector<1x32x8xbf16> to vector<32x8xbf16>
    %cst_45 = arith.constant dense<0.000000e+00> : vector<8x8xf32>
    %62 = tpu.matmul %26, %61, %cst_45 {dimension_numbers = #tpu.dot_dimension_numbers<[1], [0], [0], [1], [0, 0, 1, 1], [], []>} : vector<8x32xbf16>, vector<32x8xbf16>, vector<8x8xf32> -> vector<8x8xf32>
    %c1_46 = arith.constant 1 : index
    %c0_47 = arith.constant 0 : index
    %c0_48 = arith.constant 0 : index
    %63 = vector.load %arg6[%c1_46, %c0_47, %c0_48] : memref<4x1x8xf32, #tpu.memory_space<vmem>>, vector<1x1x8xf32>
    %64 = vector.shape_cast %63 : vector<1x1x8xf32> to vector<1x8xf32>
    %65 = vector.broadcast %64 : vector<1x8xf32> to vector<8x8xf32>
    %66 = arith.addf %62, %65 : vector<8x8xf32>
    %67 = arith.truncf %66 : vector<8x8xf32> to vector<8x8xbf16>
    %c0_49 = arith.constant 0 : index
    %c1_50 = arith.constant 1 : index
    %c0_51 = arith.constant 0 : index
    %c0_52 = arith.constant 0 : index
    %68 = vector.load %arg11[%c0_49, %c1_50, %c0_51, %c0_52] : memref<1x4x8x8xbf16, #tpu.memory_space<vmem>>, vector<1x1x8x8xbf16>
    %69 = vector.shape_cast %68 : vector<1x1x8x8xbf16> to vector<8x8xbf16>
    %70 = vector.shape_cast %67 : vector<8x8xbf16> to vector<1x1x8x8xbf16>
    tpu.vector_store %arg11[%c0_49, %c1_50, %c0_51, %c0_52], %70 {strides = array<i32>} : memref<1x4x8x8xbf16, #tpu.memory_space<vmem>>, vector<1x1x8x8xbf16>,
    %c1_53 = arith.constant 1 : index
    %c0_54 = arith.constant 0 : index
    %c0_55 = arith.constant 0 : index
    %71 = vector.load %arg7[%c1_53, %c0_54, %c0_55] : memref<4x32x8xbf16, #tpu.memory_space<vmem>>, vector<1x32x8xbf16>
    %72 = vector.shape_cast %71 : vector<1x32x8xbf16> to vector<32x8xbf16>
    %cst_56 = arith.constant dense<0.000000e+00> : vector<8x8xf32>
    %73 = tpu.matmul %26, %72, %cst_56 {dimension_numbers = #tpu.dot_dimension_numbers<[1], [0], [0], [1], [0, 0, 1, 1], [], []>} : vector<8x32xbf16>, vector<32x8xbf16>, vector<8x8xf32> -> vector<8x8xf32>
    %c1_57 = arith.constant 1 : index
    %c0_58 = arith.constant 0 : index
    %c0_59 = arith.constant 0 : index
    %74 = vector.load %arg8[%c1_57, %c0_58, %c0_59] : memref<4x1x8xf32, #tpu.memory_space<vmem>>, vector<1x1x8xf32>
    %75 = vector.shape_cast %74 : vector<1x1x8xf32> to vector<1x8xf32>
    %76 = vector.broadcast %75 : vector<1x8xf32> to vector<8x8xf32>
    %77 = arith.addf %73, %76 : vector<8x8xf32>
    %78 = arith.truncf %77 : vector<8x8xf32> to vector<8x8xbf16>
    %c0_60 = arith.constant 0 : index
    %c1_61 = arith.constant 1 : index
    %c0_62 = arith.constant 0 : index
    %c0_63 = arith.constant 0 : index
    %79 = vector.load %arg12[%c0_60, %c1_61, %c0_62, %c0_63] : memref<1x4x8x8xbf16, #tpu.memory_space<vmem>>, vector<1x1x8x8xbf16>
    %80 = vector.shape_cast %79 : vector<1x1x8x8xbf16> to vector<8x8xbf16>
    %81 = vector.shape_cast %78 : vector<8x8xbf16> to vector<1x1x8x8xbf16>
    tpu.vector_store %arg12[%c0_60, %c1_61, %c0_62, %c0_63], %81 {strides = array<i32>} : memref<1x4x8x8xbf16, #tpu.memory_space<vmem>>, vector<1x1x8x8xbf16>,
    %c1_64 = arith.constant 1 : index
    %c0_65 = arith.constant 0 : index
    %c0_66 = arith.constant 0 : index
    %82 = vector.load %arg9[%c1_64, %c0_65, %c0_66] : memref<4x32x8xbf16, #tpu.memory_space<vmem>>, vector<1x32x8xbf16>
    %83 = vector.shape_cast %82 : vector<1x32x8xbf16> to vector<32x8xbf16>
    %cst_67 = arith.constant dense<0.000000e+00> : vector<8x8xf32>
    %84 = tpu.matmul %26, %83, %cst_67 {dimension_numbers = #tpu.dot_dimension_numbers<[1], [0], [0], [1], [0, 0, 1, 1], [], []>} : vector<8x32xbf16>, vector<32x8xbf16>, vector<8x8xf32> -> vector<8x8xf32>
    %c1_68 = arith.constant 1 : index
    %c0_69 = arith.constant 0 : index
    %c0_70 = arith.constant 0 : index
    %85 = vector.load %arg10[%c1_68, %c0_69, %c0_70] : memref<4x1x8xf32, #tpu.memory_space<vmem>>, vector<1x1x8xf32>
    %86 = vector.shape_cast %85 : vector<1x1x8xf32> to vector<1x8xf32>
    %87 = vector.broadcast %86 : vector<1x8xf32> to vector<8x8xf32>
    %88 = arith.addf %84, %87 : vector<8x8xf32>
    %89 = arith.truncf %88 : vector<8x8xf32> to vector<8x8xbf16>
    %c0_71 = arith.constant 0 : index
    %c1_72 = arith.constant 1 : index
    %c0_73 = arith.constant 0 : index
    %c0_74 = arith.constant 0 : index
    %90 = vector.load %arg13[%c0_71, %c1_72, %c0_73, %c0_74] : memref<1x4x8x8xbf16, #tpu.memory_space<vmem>>, vector<1x1x8x8xbf16>
    %91 = vector.shape_cast %90 : vector<1x1x8x8xbf16> to vector<8x8xbf16>
    %92 = vector.shape_cast %89 : vector<8x8xbf16> to vector<1x1x8x8xbf16>
    tpu.vector_store %arg13[%c0_71, %c1_72, %c0_73, %c0_74], %92 {strides = array<i32>} : memref<1x4x8x8xbf16, #tpu.memory_space<vmem>>, vector<1x1x8x8xbf16>,
    %c2 = arith.constant 2 : index
    %c0_75 = arith.constant 0 : index
    %c0_76 = arith.constant 0 : index
    %93 = vector.load %arg5[%c2, %c0_75, %c0_76] : memref<4x32x8xbf16, #tpu.memory_space<vmem>>, vector<1x32x8xbf16>
    %94 = vector.shape_cast %93 : vector<1x32x8xbf16> to vector<32x8xbf16>
    %cst_77 = arith.constant dense<0.000000e+00> : vector<8x8xf32>
    %95 = tpu.matmul %26, %94, %cst_77 {dimension_numbers = #tpu.dot_dimension_numbers<[1], [0], [0], [1], [0, 0, 1, 1], [], []>} : vector<8x32xbf16>, vector<32x8xbf16>, vector<8x8xf32> -> vector<8x8xf32>
    %c2_78 = arith.constant 2 : index
    %c0_79 = arith.constant 0 : index
    %c0_80 = arith.constant 0 : index
    %96 = vector.load %arg6[%c2_78, %c0_79, %c0_80] : memref<4x1x8xf32, #tpu.memory_space<vmem>>, vector<1x1x8xf32>
    %97 = vector.shape_cast %96 : vector<1x1x8xf32> to vector<1x8xf32>
    %98 = vector.broadcast %97 : vector<1x8xf32> to vector<8x8xf32>
    %99 = arith.addf %95, %98 : vector<8x8xf32>
    %100 = arith.truncf %99 : vector<8x8xf32> to vector<8x8xbf16>
    %c0_81 = arith.constant 0 : index
    %c2_82 = arith.constant 2 : index
    %c0_83 = arith.constant 0 : index
    %c0_84 = arith.constant 0 : index
    %101 = vector.load %arg11[%c0_81, %c2_82, %c0_83, %c0_84] : memref<1x4x8x8xbf16, #tpu.memory_space<vmem>>, vector<1x1x8x8xbf16>
    %102 = vector.shape_cast %101 : vector<1x1x8x8xbf16> to vector<8x8xbf16>
    %103 = vector.shape_cast %100 : vector<8x8xbf16> to vector<1x1x8x8xbf16>
    tpu.vector_store %arg11[%c0_81, %c2_82, %c0_83, %c0_84], %103 {strides = array<i32>} : memref<1x4x8x8xbf16, #tpu.memory_space<vmem>>, vector<1x1x8x8xbf16>,
    %c2_85 = arith.constant 2 : index
    %c0_86 = arith.constant 0 : index
    %c0_87 = arith.constant 0 : index
    %104 = vector.load %arg7[%c2_85, %c0_86, %c0_87] : memref<4x32x8xbf16, #tpu.memory_space<vmem>>, vector<1x32x8xbf16>
    %105 = vector.shape_cast %104 : vector<1x32x8xbf16> to vector<32x8xbf16>
    %cst_88 = arith.constant dense<0.000000e+00> : vector<8x8xf32>
    %106 = tpu.matmul %26, %105, %cst_88 {dimension_numbers = #tpu.dot_dimension_numbers<[1], [0], [0], [1], [0, 0, 1, 1], [], []>} : vector<8x32xbf16>, vector<32x8xbf16>, vector<8x8xf32> -> vector<8x8xf32>
    %c2_89 = arith.constant 2 : index
    %c0_90 = arith.constant 0 : index
    %c0_91 = arith.constant 0 : index
    %107 = vector.load %arg8[%c2_89, %c0_90, %c0_91] : memref<4x1x8xf32, #tpu.memory_space<vmem>>, vector<1x1x8xf32>
    %108 = vector.shape_cast %107 : vector<1x1x8xf32> to vector<1x8xf32>
    %109 = vector.broadcast %108 : vector<1x8xf32> to vector<8x8xf32>
    %110 = arith.addf %106, %109 : vector<8x8xf32>
    %111 = arith.truncf %110 : vector<8x8xf32> to vector<8x8xbf16>
    %c0_92 = arith.constant 0 : index
    %c2_93 = arith.constant 2 : index
    %c0_94 = arith.constant 0 : index
    %c0_95 = arith.constant 0 : index
    %112 = vector.load %arg12[%c0_92, %c2_93, %c0_94, %c0_95] : memref<1x4x8x8xbf16, #tpu.memory_space<vmem>>, vector<1x1x8x8xbf16>
    %113 = vector.shape_cast %112 : vector<1x1x8x8xbf16> to vector<8x8xbf16>
    %114 = vector.shape_cast %111 : vector<8x8xbf16> to vector<1x1x8x8xbf16>
    tpu.vector_store %arg12[%c0_92, %c2_93, %c0_94, %c0_95], %114 {strides = array<i32>} : memref<1x4x8x8xbf16, #tpu.memory_space<vmem>>, vector<1x1x8x8xbf16>,
    %c2_96 = arith.constant 2 : index
    %c0_97 = arith.constant 0 : index
    %c0_98 = arith.constant 0 : index
    %115 = vector.load %arg9[%c2_96, %c0_97, %c0_98] : memref<4x32x8xbf16, #tpu.memory_space<vmem>>, vector<1x32x8xbf16>
    %116 = vector.shape_cast %115 : vector<1x32x8xbf16> to vector<32x8xbf16>
    %cst_99 = arith.constant dense<0.000000e+00> : vector<8x8xf32>
    %117 = tpu.matmul %26, %116, %cst_99 {dimension_numbers = #tpu.dot_dimension_numbers<[1], [0], [0], [1], [0, 0, 1, 1], [], []>} : vector<8x32xbf16>, vector<32x8xbf16>, vector<8x8xf32> -> vector<8x8xf32>
    %c2_100 = arith.constant 2 : index
    %c0_101 = arith.constant 0 : index
    %c0_102 = arith.constant 0 : index
    %118 = vector.load %arg10[%c2_100, %c0_101, %c0_102] : memref<4x1x8xf32, #tpu.memory_space<vmem>>, vector<1x1x8xf32>
    %119 = vector.shape_cast %118 : vector<1x1x8xf32> to vector<1x8xf32>
    %120 = vector.broadcast %119 : vector<1x8xf32> to vector<8x8xf32>
    %121 = arith.addf %117, %120 : vector<8x8xf32>
    %122 = arith.truncf %121 : vector<8x8xf32> to vector<8x8xbf16>
    %c0_103 = arith.constant 0 : index
    %c2_104 = arith.constant 2 : index
    %c0_105 = arith.constant 0 : index
    %c0_106 = arith.constant 0 : index
    %123 = vector.load %arg13[%c0_103, %c2_104, %c0_105, %c0_106] : memref<1x4x8x8xbf16, #tpu.memory_space<vmem>>, vector<1x1x8x8xbf16>
    %124 = vector.shape_cast %123 : vector<1x1x8x8xbf16> to vector<8x8xbf16>
    %125 = vector.shape_cast %122 : vector<8x8xbf16> to vector<1x1x8x8xbf16>
    tpu.vector_store %arg13[%c0_103, %c2_104, %c0_105, %c0_106], %125 {strides = array<i32>} : memref<1x4x8x8xbf16, #tpu.memory_space<vmem>>, vector<1x1x8x8xbf16>,
    %c3 = arith.constant 3 : index
    %c0_107 = arith.constant 0 : index
    %c0_108 = arith.constant 0 : index
    %126 = vector.load %arg5[%c3, %c0_107, %c0_108] : memref<4x32x8xbf16, #tpu.memory_space<vmem>>, vector<1x32x8xbf16>
    %127 = vector.shape_cast %126 : vector<1x32x8xbf16> to vector<32x8xbf16>
    %cst_109 = arith.constant dense<0.000000e+00> : vector<8x8xf32>
    %128 = tpu.matmul %26, %127, %cst_109 {dimension_numbers = #tpu.dot_dimension_numbers<[1], [0], [0], [1], [0, 0, 1, 1], [], []>} : vector<8x32xbf16>, vector<32x8xbf16>, vector<8x8xf32> -> vector<8x8xf32>
    %c3_110 = arith.constant 3 : index
    %c0_111 = arith.constant 0 : index
    %c0_112 = arith.constant 0 : index
    %129 = vector.load %arg6[%c3_110, %c0_111, %c0_112] : memref<4x1x8xf32, #tpu.memory_space<vmem>>, vector<1x1x8xf32>
    %130 = vector.shape_cast %129 : vector<1x1x8xf32> to vector<1x8xf32>
    %131 = vector.broadcast %130 : vector<1x8xf32> to vector<8x8xf32>
    %132 = arith.addf %128, %131 : vector<8x8xf32>
    %133 = arith.truncf %132 : vector<8x8xf32> to vector<8x8xbf16>
    %c0_113 = arith.constant 0 : index
    %c3_114 = arith.constant 3 : index
    %c0_115 = arith.constant 0 : index
    %c0_116 = arith.constant 0 : index
    %134 = vector.load %arg11[%c0_113, %c3_114, %c0_115, %c0_116] : memref<1x4x8x8xbf16, #tpu.memory_space<vmem>>, vector<1x1x8x8xbf16>
    %135 = vector.shape_cast %134 : vector<1x1x8x8xbf16> to vector<8x8xbf16>
    %136 = vector.shape_cast %133 : vector<8x8xbf16> to vector<1x1x8x8xbf16>
    tpu.vector_store %arg11[%c0_113, %c3_114, %c0_115, %c0_116], %136 {strides = array<i32>} : memref<1x4x8x8xbf16, #tpu.memory_space<vmem>>, vector<1x1x8x8xbf16>,
    %c3_117 = arith.constant 3 : index
    %c0_118 = arith.constant 0 : index
    %c0_119 = arith.constant 0 : index
    %137 = vector.load %arg7[%c3_117, %c0_118, %c0_119] : memref<4x32x8xbf16, #tpu.memory_space<vmem>>, vector<1x32x8xbf16>
    %138 = vector.shape_cast %137 : vector<1x32x8xbf16> to vector<32x8xbf16>
    %cst_120 = arith.constant dense<0.000000e+00> : vector<8x8xf32>
    %139 = tpu.matmul %26, %138, %cst_120 {dimension_numbers = #tpu.dot_dimension_numbers<[1], [0], [0], [1], [0, 0, 1, 1], [], []>} : vector<8x32xbf16>, vector<32x8xbf16>, vector<8x8xf32> -> vector<8x8xf32>
    %c3_121 = arith.constant 3 : index
    %c0_122 = arith.constant 0 : index
    %c0_123 = arith.constant 0 : index
    %140 = vector.load %arg8[%c3_121, %c0_122, %c0_123] : memref<4x1x8xf32, #tpu.memory_space<vmem>>, vector<1x1x8xf32>
    %141 = vector.shape_cast %140 : vector<1x1x8xf32> to vector<1x8xf32>
    %142 = vector.broadcast %141 : vector<1x8xf32> to vector<8x8xf32>
    %143 = arith.addf %139, %142 : vector<8x8xf32>
    %144 = arith.truncf %143 : vector<8x8xf32> to vector<8x8xbf16>
    %c0_124 = arith.constant 0 : index
    %c3_125 = arith.constant 3 : index
    %c0_126 = arith.constant 0 : index
    %c0_127 = arith.constant 0 : index
    %145 = vector.load %arg12[%c0_124, %c3_125, %c0_126, %c0_127] : memref<1x4x8x8xbf16, #tpu.memory_space<vmem>>, vector<1x1x8x8xbf16>
    %146 = vector.shape_cast %145 : vector<1x1x8x8xbf16> to vector<8x8xbf16>
    %147 = vector.shape_cast %144 : vector<8x8xbf16> to vector<1x1x8x8xbf16>
    tpu.vector_store %arg12[%c0_124, %c3_125, %c0_126, %c0_127], %147 {strides = array<i32>} : memref<1x4x8x8xbf16, #tpu.memory_space<vmem>>, vector<1x1x8x8xbf16>,
    %c3_128 = arith.constant 3 : index
    %c0_129 = arith.constant 0 : index
    %c0_130 = arith.constant 0 : index
    %148 = vector.load %arg9[%c3_128, %c0_129, %c0_130] : memref<4x32x8xbf16, #tpu.memory_space<vmem>>, vector<1x32x8xbf16>
    %149 = vector.shape_cast %148 : vector<1x32x8xbf16> to vector<32x8xbf16>
    %cst_131 = arith.constant dense<0.000000e+00> : vector<8x8xf32>
    %150 = tpu.matmul %26, %149, %cst_131 {dimension_numbers = #tpu.dot_dimension_numbers<[1], [0], [0], [1], [0, 0, 1, 1], [], []>} : vector<8x32xbf16>, vector<32x8xbf16>, vector<8x8xf32> -> vector<8x8xf32>
    %c3_132 = arith.constant 3 : index
    %c0_133 = arith.constant 0 : index
    %c0_134 = arith.constant 0 : index
    %151 = vector.load %arg10[%c3_132, %c0_133, %c0_134] : memref<4x1x8xf32, #tpu.memory_space<vmem>>, vector<1x1x8xf32>
    %152 = vector.shape_cast %151 : vector<1x1x8xf32> to vector<1x8xf32>
    %153 = vector.broadcast %152 : vector<1x8xf32> to vector<8x8xf32>
    %154 = arith.addf %150, %153 : vector<8x8xf32>
    %155 = arith.truncf %154 : vector<8x8xf32> to vector<8x8xbf16>
    %c0_135 = arith.constant 0 : index
    %c3_136 = arith.constant 3 : index
    %c0_137 = arith.constant 0 : index
    %c0_138 = arith.constant 0 : index
    %156 = vector.load %arg13[%c0_135, %c3_136, %c0_137, %c0_138] : memref<1x4x8x8xbf16, #tpu.memory_space<vmem>>, vector<1x1x8x8xbf16>
    %157 = vector.shape_cast %156 : vector<1x1x8x8xbf16> to vector<8x8xbf16>
    %158 = vector.shape_cast %155 : vector<8x8xbf16> to vector<1x1x8x8xbf16>
    tpu.vector_store %arg13[%c0_135, %c3_136, %c0_137, %c0_138], %158 {strides = array<i32>} : memref<1x4x8x8xbf16, #tpu.memory_space<vmem>>, vector<1x1x8x8xbf16>,
    return
  }
  func.func @transform_0(%arg0: i32, %arg1: i32) -> (i32, i32, i32) {
    %c0_i32 = arith.constant 0 : i32
    %c0_i32_0 = arith.constant 0 : i32
    return %arg0, %arg1, %c0_i32 : i32, i32, i32
  }
  func.func @transform_1(%arg0: i32, %arg1: i32) -> (i32, i32) {
    %c0_i32 = arith.constant 0 : i32
    %c0_i32_0 = arith.constant 0 : i32
    %c0_i32_1 = arith.constant 0 : i32
    return %c0_i32, %c0_i32_0 : i32, i32
  }
  func.func @transform_2(%arg0: i32, %arg1: i32) -> (i32, i32) {
    %c0_i32 = arith.constant 0 : i32
    %c0_i32_0 = arith.constant 0 : i32
    %c0_i32_1 = arith.constant 0 : i32
    return %c0_i32, %c0_i32_0 : i32, i32
  }
  func.func @transform_3(%arg0: i32, %arg1: i32) -> (i32, i32, i32) {
    %c0_i32 = arith.constant 0 : i32
    %c0_i32_0 = arith.constant 0 : i32
    %c0_i32_1 = arith.constant 0 : i32
    %c0_i32_2 = arith.constant 0 : i32
    return %c0_i32, %c0_i32_0, %c0_i32_1 : i32, i32, i32
  }
  func.func @transform_4(%arg0: i32, %arg1: i32) -> (i32, i32, i32) {
    %c0_i32 = arith.constant 0 : i32
    %c0_i32_0 = arith.constant 0 : i32
    %c0_i32_1 = arith.constant 0 : i32
    %c0_i32_2 = arith.constant 0 : i32
    return %c0_i32, %c0_i32_0, %c0_i32_1 : i32, i32, i32
  }
  func.func @transform_5(%arg0: i32, %arg1: i32) -> (i32, i32, i32) {
    %c0_i32 = arith.constant 0 : i32
    %c0_i32_0 = arith.constant 0 : i32
    %c0_i32_1 = arith.constant 0 : i32
    %c0_i32_2 = arith.constant 0 : i32
    return %c0_i32, %c0_i32_0, %c0_i32_1 : i32, i32, i32
  }
  func.func @transform_6(%arg0: i32, %arg1: i32) -> (i32, i32, i32) {
    %c0_i32 = arith.constant 0 : i32
    %c0_i32_0 = arith.constant 0 : i32
    %c0_i32_1 = arith.constant 0 : i32
    %c0_i32_2 = arith.constant 0 : i32
    return %c0_i32, %c0_i32_0, %c0_i32_1 : i32, i32, i32
  }
  func.func @transform_7(%arg0: i32, %arg1: i32) -> (i32, i32, i32) {
    %c0_i32 = arith.constant 0 : i32
    %c0_i32_0 = arith.constant 0 : i32
    %c0_i32_1 = arith.constant 0 : i32
    %c0_i32_2 = arith.constant 0 : i32
    return %c0_i32, %c0_i32_0, %c0_i32_1 : i32, i32, i32
  }
  func.func @transform_8(%arg0: i32, %arg1: i32) -> (i32, i32, i32) {
    %c0_i32 = arith.constant 0 : i32
    %c0_i32_0 = arith.constant 0 : i32
    %c0_i32_1 = arith.constant 0 : i32
    %c0_i32_2 = arith.constant 0 : i32
    return %c0_i32, %c0_i32_0, %c0_i32_1 : i32, i32, i32
  }
  func.func @transform_9(%arg0: i32, %arg1: i32) -> (i32, i32, i32, i32) {
    %c0_i32 = arith.constant 0 : i32
    %c0_i32_0 = arith.constant 0 : i32
    %c0_i32_1 = arith.constant 0 : i32
    return %arg0, %c0_i32, %arg1, %c0_i32_0 : i32, i32, i32, i32
  }
  func.func @transform_10(%arg0: i32, %arg1: i32) -> (i32, i32, i32, i32) {
    %c0_i32 = arith.constant 0 : i32
    %c0_i32_0 = arith.constant 0 : i32
    %c0_i32_1 = arith.constant 0 : i32
    return %arg0, %c0_i32, %arg1, %c0_i32_0 : i32, i32, i32, i32
  }
  func.func @transform_11(%arg0: i32, %arg1: i32) -> (i32, i32, i32, i32) {
    %c0_i32 = arith.constant 0 : i32
    %c0_i32_0 = arith.constant 0 : i32
    %c0_i32_1 = arith.constant 0 : i32
    return %arg0, %c0_i32, %arg1, %c0_i32_0 : i32, i32, i32, i32
  }
}

</mosaic_0001>

<llo_original>
// kernel: tpu_custom_call.1
$region0: #{tpu_custom_call.1}
  #allocation0 [shape = 'u32[]', space=smem, size = 0x4, offset = 0x4, fixed_abs, tag = 'smem constant byte address 0x4 - core index']
  #allocation1 [shape = 'u32[144,128]{1,0:T(1,128)}', space=vmem, size = 0x12000, scoped, tag = 'internal scratch']
  %s0 = inlined_call_operand.vmem [shape: f32[2,8,32], index: 0, kind: input, shape index: {}]
  %s1 = inlined_call_operand.vmem [shape: f32[1,32], index: 1, kind: input, shape index: {}]
  %s2 = inlined_call_operand.vmem [shape: f32[1,32], index: 2, kind: input, shape index: {}]
  %s3 = inlined_call_operand.vmem [shape: bf16[4,32,8], index: 3, kind: input, shape index: {}]
  %s4 = inlined_call_operand.vmem [shape: f32[4,1,8], index: 4, kind: input, shape index: {}]
  %s5 = inlined_call_operand.vmem [shape: bf16[4,32,8], index: 5, kind: input, shape index: {}]
  %s6 = inlined_call_operand.vmem [shape: f32[4,1,8], index: 6, kind: input, shape index: {}]
  %s7 = inlined_call_operand.vmem [shape: bf16[4,32,8], index: 7, kind: input, shape index: {}]
  %s8 = inlined_call_operand.vmem [shape: f32[4,1,8], index: 8, kind: input, shape index: {}]
  %s9 = inlined_call_operand.hbm [shape: bf16[2,4,8,8], index: 9, kind: output, shape index: {0}]
  %s10 = inlined_call_operand.hbm [shape: bf16[2,4,8,8], index: 10, kind: output, shape index: {1}]
  %s11 = inlined_call_operand.hbm [shape: bf16[2,4,8,8], index: 11, kind: output, shape index: {2}]
  %12 = xla_tuple %s9, %s10, %s11
  %s13 = sld [smem:[#allocation0]]
  $region85: #{tpu_custom_call.1} parent=0
    _
  %s15 = ssub.s32 1, %s13
  %s16 = scalar_select 0, %s15, %s13
  $region1: #{tpu_custom_call.1} parent=0
    #allocation2 [shape = 'u8[16384]{0}', space=vmem, size = 0x4000, scoped, tag = 'output window, operand 0']
    #allocation3 [shape = 's32[2]{0}', space=sflag, size = 0x8, scoped, tag = 'scoped memory for tpu_custom_call.1']
    #allocation4 [shape = 'u8[16384]{0}', space=vmem, size = 0x4000, scoped, tag = 'output window, operand 1']
    #allocation5 [shape = 's32[2]{0}', space=sflag, size = 0x8, scoped, tag = 'scoped memory for tpu_custom_call.1']
    #allocation6 [shape = 'u8[16384]{0}', space=vmem, size = 0x4000, scoped, tag = 'output window, operand 2']
    %17 = vsyncpa [#allocation3], 0
    %s18 = scalar_lea.sflag [#allocation3], 1
    %19 = vsyncpa %s18, 0
    %20 = vsyncpa [#allocation5], 0
    %s21 = scalar_lea.sflag [#allocation5], 1
    %22 = vsyncpa %s21, 0
    loop: start=0, step=1, limit=4
    $region2: #{tpu_custom_call.1} parent=1 // loop_pre_header
      _
    $region3: #{tpu_custom_call.1} parent=1 // loop_header
      %s24 = sphi 0, %s28
      %p25 = scmp.ge.s32.totalorder %s24, 4
      %s31 = sphi 0, %s43
      %s32 = sphi 0, %s39
      %s33 = sphi 0, %s31
      %s34 = sphi 0, %s32
      %s35 = sphi 0, %s33
      %s36 = sphi 0, %s34
      %s48 = sphi 0, %s50
      %s51 = sphi 0, %s48
      %s52 = sphi 0, %s51
      %s68 = sphi 0, %s52
      %s72 = sphi 0, %s72
      %s74 = sphi 0, %s72
      %s75 = sphi 0, %s74
      %s89 = sphi 0, %s75
      %s93 = sphi 0, %s93
      %s95 = sphi 0, %s93
      %s96 = sphi 0, %s95
      %s110 = sphi 0, %s96
      %s114 = sphi 0, %s114
      %s116 = sphi 0, %s114
      %s117 = sphi 0, %s116
      %s131 = sphi 0, %s117
      %s135 = sphi 0, %s135
      %s137 = sphi 0, %s135
      %s138 = sphi 0, %s137
      %s152 = sphi 0, %s138
      %s156 = sphi 0, %s156
      %s158 = sphi 0, %s156
      %s159 = sphi 0, %s158
      %s173 = sphi 0, %s159
      %s177 = sphi 0, %s177
      %s179 = sphi 0, %s177
      %s180 = sphi 0, %s179
      %s194 = sphi 0, %s180
      %s198 = sphi 0, %s198
      %s200 = sphi 0, %s198
      %s201 = sphi 0, %s200
      %s215 = sphi 0, %s201
      %s219 = sphi 0, %s219
      %s221 = sphi 0, %s219
      %s222 = sphi 0, %s221
      %s236 = sphi 0, %s222
      %s244 = sphi 0, %s246
      %s247 = sphi 0, %s244
      %s248 = sphi 0, %s247
      %s264 = sphi 0, %s248
      %s272 = sphi 0, %s274
      %s275 = sphi 0, %s272
      %s276 = sphi 0, %s275
      %s292 = sphi 0, %s276
      %s300 = sphi 0, %s302
      %s303 = sphi 0, %s300
      %s304 = sphi 0, %s303
      %s320 = sphi 0, %s304
    $region4: #{tpu_custom_call.1} parent=1 // loop_header_branch
      %27 = sbr.rel (%p25) target = $region8
    $region5: #{tpu_custom_call.1} parent=1 // loop_body
      %s29 = ssub.s32 %s24, 1
      %s30 = ssub.s32 %s24, 2
      %s37 = sadd.s32 1, %s32
      %p38 = scmp.ge.s32.totalorder %s37, 1
      %s39 = scalar_select %p38, 0, %s37
      %s40 = sadd.s32 1, %s31
      %s41 = scalar_select %p38, %s40, %s31
      %p42 = scmp.ge.s32.totalorder %s41, 2
      %s43 = scalar_select %p42, 0, %s41
      %s44 = ssub.s32 %s31, %s43
      %s45 = ssub.s32 %s32, %s39
      %s46 = sor.u32 %s44, %s45
      %p47 = scmp.eq.s32.totalorder %s46, 0
      %s49 = sadd.s32 %s48, 1
      %s50 = scalar_select %p47, %s48, %s49
      %p53 = pneg %p47
      %p54 = scmp.eq.s32.totalorder %s24, 1
      %p55 = por %p53, %p54
      %p56 = scmp.ne.s32.totalorder %s48, %s51
      %p57 = scmp.eq.s32.totalorder %s24, 0
      %p58 = por %p56, %p57
      %p59 = scmp.ne.s32.totalorder %s48, %s51
      %p60 = scmp.eq.s32.totalorder %s29, 1
      %p61 = por %p59, %p60
      %p62 = scmp.ne.s32.totalorder %s51, %s52
      %p63 = scmp.eq.s32.totalorder %s29, 0
      %p64 = por %p62, %p63
      %p65 = scmp.ne.s32.totalorder %s51, %s52
      %p66 = scmp.eq.s32.totalorder %s30, 1
      %p67 = por %p65, %p66
      %p69 = scmp.ne.s32.totalorder %s52, %s68
      %p70 = scmp.eq.s32.totalorder %s30, 0
      %p71 = por %p69, %p70
      %s73 = sadd.s32 %s72, 1
      %p76 = scmp.eq.s32.totalorder %s24, 1
      %p77 = scmp.ne.s32.totalorder %s72, %s74
      %p78 = scmp.eq.s32.totalorder %s24, 0
      %p79 = por %p77, %p78
      %p80 = scmp.ne.s32.totalorder %s72, %s74
      %p81 = scmp.eq.s32.totalorder %s29, 1
      %p82 = por %p80, %p81
      %p83 = scmp.ne.s32.totalorder %s74, %s75
      %p84 = scmp.eq.s32.totalorder %s29, 0
      %p85 = por %p83, %p84
      %p86 = scmp.ne.s32.totalorder %s74, %s75
      %p87 = scmp.eq.s32.totalorder %s30, 1
      %p88 = por %p86, %p87
      %p90 = scmp.ne.s32.totalorder %s75, %s89
      %p91 = scmp.eq.s32.totalorder %s30, 0
      %p92 = por %p90, %p91
      %s94 = sadd.s32 %s93, 1
      %p97 = scmp.eq.s32.totalorder %s24, 1
      %p98 = scmp.ne.s32.totalorder %s93, %s95
      %p99 = scmp.eq.s32.totalorder %s24, 0
      %p100 = por %p98, %p99
      %p101 = scmp.ne.s32.totalorder %s93, %s95
      %p102 = scmp.eq.s32.totalorder %s29, 1
      %p103 = por %p101, %p102
      %p104 = scmp.ne.s32.totalorder %s95, %s96
      %p105 = scmp.eq.s32.totalorder %s29, 0
      %p106 = por %p104, %p105
      %p107 = scmp.ne.s32.totalorder %s95, %s96
      %p108 = scmp.eq.s32.totalorder %s30, 1
      %p109 = por %p107, %p108
      %p111 = scmp.ne.s32.totalorder %s96, %s110
      %p112 = scmp.eq.s32.totalorder %s30, 0
      %p113 = por %p111, %p112
      %s115 = sadd.s32 %s114, 1
      %p118 = scmp.eq.s32.totalorder %s24, 1
      %p119 = scmp.ne.s32.totalorder %s114, %s116
      %p120 = scmp.eq.s32.totalorder %s24, 0
      %p121 = por %p119, %p120
      %p122 = scmp.ne.s32.totalorder %s114, %s116
      %p123 = scmp.eq.s32.totalorder %s29, 1
      %p124 = por %p122, %p123
      %p125 = scmp.ne.s32.totalorder %s116, %s117
      %p126 = scmp.eq.s32.totalorder %s29, 0
      %p127 = por %p125, %p126
      %p128 = scmp.ne.s32.totalorder %s116, %s117
      %p129 = scmp.eq.s32.totalorder %s30, 1
      %p130 = por %p128, %p129
      %p132 = scmp.ne.s32.totalorder %s117, %s131
      %p133 = scmp.eq.s32.totalorder %s30, 0
      %p134 = por %p132, %p133
      %s136 = sadd.s32 %s135, 1
      %p139 = scmp.eq.s32.totalorder %s24, 1
      %p140 = scmp.ne.s32.totalorder %s135, %s137
      %p141 = scmp.eq.s32.totalorder %s24, 0
      %p142 = por %p140, %p141
      %p143 = scmp.ne.s32.totalorder %s135, %s137
      %p144 = scmp.eq.s32.totalorder %s29, 1
      %p145 = por %p143, %p144
      %p146 = scmp.ne.s32.totalorder %s137, %s138
      %p147 = scmp.eq.s32.totalorder %s29, 0
      %p148 = por %p146, %p147
      %p149 = scmp.ne.s32.totalorder %s137, %s138
      %p150 = scmp.eq.s32.totalorder %s30, 1
      %p151 = por %p149, %p150
      %p153 = scmp.ne.s32.totalorder %s138, %s152
      %p154 = scmp.eq.s32.totalorder %s30, 0
      %p155 = por %p153, %p154
      %s157 = sadd.s32 %s156, 1
      %p160 = scmp.eq.s32.totalorder %s24, 1
      %p161 = scmp.ne.s32.totalorder %s156, %s158
      %p162 = scmp.eq.s32.totalorder %s24, 0
      %p163 = por %p161, %p162
      %p164 = scmp.ne.s32.totalorder %s156, %s158
      %p165 = scmp.eq.s32.totalorder %s29, 1
      %p166 = por %p164, %p165
      %p167 = scmp.ne.s32.totalorder %s158, %s159
      %p168 = scmp.eq.s32.totalorder %s29, 0
      %p169 = por %p167, %p168
      %p170 = scmp.ne.s32.totalorder %s158, %s159
      %p171 = scmp.eq.s32.totalorder %s30, 1
      %p172 = por %p170, %p171
      %p174 = scmp.ne.s32.totalorder %s159, %s173
      %p175 = scmp.eq.s32.totalorder %s30, 0
      %p176 = por %p174, %p175
      %s178 = sadd.s32 %s177, 1
      %p181 = scmp.eq.s32.totalorder %s24, 1
      %p182 = scmp.ne.s32.totalorder %s177, %s179
      %p183 = scmp.eq.s32.totalorder %s24, 0
      %p184 = por %p182, %p183
      %p185 = scmp.ne.s32.totalorder %s177, %s179
      %p186 = scmp.eq.s32.totalorder %s29, 1
      %p187 = por %p185, %p186
      %p188 = scmp.ne.s32.totalorder %s179, %s180
      %p189 = scmp.eq.s32.totalorder %s29, 0
      %p190 = por %p188, %p189
      %p191 = scmp.ne.s32.totalorder %s179, %s180
      %p192 = scmp.eq.s32.totalorder %s30, 1
      %p193 = por %p191, %p192
      %p195 = scmp.ne.s32.totalorder %s180, %s194
      %p196 = scmp.eq.s32.totalorder %s30, 0
      %p197 = por %p195, %p196
      %s199 = sadd.s32 %s198, 1
      %p202 = scmp.eq.s32.totalorder %s24, 1
      %p203 = scmp.ne.s32.totalorder %s198, %s200
      %p204 = scmp.eq.s32.totalorder %s24, 0
      %p205 = por %p203, %p204
      %p206 = scmp.ne.s32.totalorder %s198, %s200
      %p207 = scmp.eq.s32.totalorder %s29, 1
      %p208 = por %p206, %p207
      %p209 = scmp.ne.s32.totalorder %s200, %s201
      %p210 = scmp.eq.s32.totalorder %s29, 0
      %p211 = por %p209, %p210
      %p212 = scmp.ne.s32.totalorder %s200, %s201
      %p213 = scmp.eq.s32.totalorder %s30, 1
      %p214 = por %p212, %p213
      %p216 = scmp.ne.s32.totalorder %s201, %s215
      %p217 = scmp.eq.s32.totalorder %s30, 0
      %p218 = por %p216, %p217
      %s220 = sadd.s32 %s219, 1
      %p223 = scmp.eq.s32.totalorder %s24, 1
      %p224 = scmp.ne.s32.totalorder %s219, %s221
      %p225 = scmp.eq.s32.totalorder %s24, 0
      %p226 = por %p224, %p225
      %p227 = scmp.ne.s32.totalorder %s219, %s221
      %p228 = scmp.eq.s32.totalorder %s29, 1
      %p229 = por %p227, %p228
      %p230 = scmp.ne.s32.totalorder %s221, %s222
      %p231 = scmp.eq.s32.totalorder %s29, 0
      %p232 = por %p230, %p231
      %p233 = scmp.ne.s32.totalorder %s221, %s222
      %p234 = scmp.eq.s32.totalorder %s30, 1
      %p235 = por %p233, %p234
      %p237 = scmp.ne.s32.totalorder %s222, %s236
      %p238 = scmp.eq.s32.totalorder %s30, 0
      %p239 = por %p237, %p238
      %s240 = ssub.s32 %s31, %s43
      %s241 = ssub.s32 %s32, %s39
      %s242 = sor.u32 %s240, %s241
      %p243 = scmp.eq.s32.totalorder %s242, 0
      %s245 = sadd.s32 %s244, 1
      %s246 = scalar_select %p243, %s244, %s245
      %p249 = pneg %p243
      %p250 = scmp.eq.s32.totalorder %s24, 1
      %p251 = por %p249, %p250
      %p252 = scmp.ne.s32.totalorder %s244, %s247
      %p253 = scmp.eq.s32.totalorder %s24, 0
      %p254 = por %p252, %p253
      %p255 = scmp.ne.s32.totalorder %s244, %s247
      %p256 = scmp.eq.s32.totalorder %s29, 1
      %p257 = por %p255, %p256
      %p258 = scmp.ne.s32.totalorder %s247, %s248
      %p259 = scmp.eq.s32.totalorder %s29, 0
      %p260 = por %p258, %p259
      %p261 = scmp.ne.s32.totalorder %s247, %s248
      %p262 = scmp.eq.s32.totalorder %s30, 1
      %p263 = por %p261, %p262
      %p265 = scmp.ne.s32.totalorder %s248, %s264
      %p266 = scmp.eq.s32.totalorder %s30, 0
      %p267 = por %p265, %p266
      %s268 = ssub.s32 %s31, %s43
      %s269 = ssub.s32 %s32, %s39
      %s270 = sor.u32 %s268, %s269
      %p271 = scmp.eq.s32.totalorder %s270, 0
      %s273 = sadd.s32 %s272, 1
      %s274 = scalar_select %p271, %s272, %s273
      %p277 = pneg %p271
      %p278 = scmp.eq.s32.totalorder %s24, 1
      %p279 = por %p277, %p278
      %p280 = scmp.ne.s32.totalorder %s272, %s275
      %p281 = scmp.eq.s32.totalorder %s24, 0
      %p282 = por %p280, %p281
      %p283 = scmp.ne.s32.totalorder %s272, %s275
      %p284 = scmp.eq.s32.totalorder %s29, 1
      %p285 = por %p283, %p284
      %p286 = scmp.ne.s32.totalorder %s275, %s276
      %p287 = scmp.eq.s32.totalorder %s29, 0
      %p288 = por %p286, %p287
      %p289 = scmp.ne.s32.totalorder %s275, %s276
      %p290 = scmp.eq.s32.totalorder %s30, 1
      %p291 = por %p289, %p290
      %p293 = scmp.ne.s32.totalorder %s276, %s292
      %p294 = scmp.eq.s32.totalorder %s30, 0
      %p295 = por %p293, %p294
      %s296 = ssub.s32 %s31, %s43
      %s297 = ssub.s32 %s32, %s39
      %s298 = sor.u32 %s296, %s297
      %p299 = scmp.eq.s32.totalorder %s298, 0
      %s301 = sadd.s32 %s300, 1
      %s302 = scalar_select %p299, %s300, %s301
      %p305 = pneg %p299
      %p306 = scmp.eq.s32.totalorder %s24, 1
      %p307 = por %p305, %p306
      %p308 = scmp.ne.s32.totalorder %s300, %s303
      %p309 = scmp.eq.s32.totalorder %s24, 0
      %p310 = por %p308, %p309
      %p311 = scmp.ne.s32.totalorder %s300, %s303
      %p312 = scmp.eq.s32.totalorder %s29, 1
      %p313 = por %p311, %p312
      %p314 = scmp.ne.s32.totalorder %s303, %s304
      %p315 = scmp.eq.s32.totalorder %s29, 0
      %p316 = por %p314, %p315
      %p317 = scmp.ne.s32.totalorder %s303, %s304
      %p318 = scmp.eq.s32.totalorder %s30, 1
      %p319 = por %p317, %p318
      %p321 = scmp.ne.s32.totalorder %s304, %s320
      %p322 = scmp.eq.s32.totalorder %s30, 0
      %p323 = por %p321, %p322
      %p324 = scmp.le.s32.totalorder 1, %s24
      %p325 = scmp.lt.s32.totalorder %s24, 3
      %p326 = pnand %p324, %p325
      %p327 = pneg %p326
      // Predicated region
      $region9: #{tpu_custom_call.1} parent=5 // pred_check
        _
      $region10: #{tpu_custom_call.1} parent=5 // pred_check_branch
        %329 = sbr.rel (%p326) target = $region12
      $region11: #{tpu_custom_call.1} parent=5 // pred_region
        %s330 = ssub.s32 %s24, 1
        // Predicated region
        $region13: #{tpu_custom_call.1} parent=11 // pred_check
          %p331 = pneg %p85
        $region14: #{tpu_custom_call.1} parent=11 // pred_check_branch
          %333 = sbr.rel (%p331) target = $region16
        $region15: #{tpu_custom_call.1} parent=11 // pred_region
          _
        $region16: #{tpu_custom_call.1} parent=11 // pred_fallthru
          _
        // Predicated region
        $region17: #{tpu_custom_call.1} parent=11 // pred_check
          %p334 = pneg %p106
        $region18: #{tpu_custom_call.1} parent=11 // pred_check_branch
          %336 = sbr.rel (%p334) target = $region20
        $region19: #{tpu_custom_call.1} parent=11 // pred_region
          _
        $region20: #{tpu_custom_call.1} parent=11 // pred_fallthru
          _
        // Predicated region
        $region21: #{tpu_custom_call.1} parent=11 // pred_check
          %p337 = pneg %p127
        $region22: #{tpu_custom_call.1} parent=11 // pred_check_branch
          %339 = sbr.rel (%p337) target = $region24
        $region23: #{tpu_custom_call.1} parent=11 // pred_region
          _
        $region24: #{tpu_custom_call.1} parent=11 // pred_fallthru
          _
        // Predicated region
        $region25: #{tpu_custom_call.1} parent=11 // pred_check
          %p340 = pneg %p148
        $region26: #{tpu_custom_call.1} parent=11 // pred_check_branch
          %342 = sbr.rel (%p340) target = $region28
        $region27: #{tpu_custom_call.1} parent=11 // pred_region
          _
        $region28: #{tpu_custom_call.1} parent=11 // pred_fallthru
          _
        // Predicated region
        $region29: #{tpu_custom_call.1} parent=11 // pred_check
          %p343 = pneg %p169
        $region30: #{tpu_custom_call.1} parent=11 // pred_check_branch
          %345 = sbr.rel (%p343) target = $region32
        $region31: #{tpu_custom_call.1} parent=11 // pred_region
          _
        $region32: #{tpu_custom_call.1} parent=11 // pred_fallthru
          _
        // Predicated region
        $region33: #{tpu_custom_call.1} parent=11 // pred_check
          %p346 = pneg %p190
        $region34: #{tpu_custom_call.1} parent=11 // pred_check_branch
          %348 = sbr.rel (%p346) target = $region36
        $region35: #{tpu_custom_call.1} parent=11 // pred_region
          _
        $region36: #{tpu_custom_call.1} parent=11 // pred_fallthru
          _
        // Predicated region
        $region37: #{tpu_custom_call.1} parent=11 // pred_check
          %p349 = pneg %p211
        $region38: #{tpu_custom_call.1} parent=11 // pred_check_branch
          %351 = sbr.rel (%p349) target = $region40
        $region39: #{tpu_custom_call.1} parent=11 // pred_region
          _
        $region40: #{tpu_custom_call.1} parent=11 // pred_fallthru
          _
        // Predicated region
        $region41: #{tpu_custom_call.1} parent=11 // pred_check
          %p352 = pneg %p232
        $region42: #{tpu_custom_call.1} parent=11 // pred_check_branch
          %354 = sbr.rel (%p352) target = $region44
        $region43: #{tpu_custom_call.1} parent=11 // pred_region
          _
        $region44: #{tpu_custom_call.1} parent=11 // pred_fallthru
          _
      $region12: #{tpu_custom_call.1} parent=5 // pred_fallthru
        _
      %p355 = scmp.lt.s32.totalorder %s24, 2
      // Predicated region
      $region45: #{tpu_custom_call.1} parent=5 // pred_check
        %p356 = pneg %p355
      $region46: #{tpu_custom_call.1} parent=5 // pred_check_branch
        %358 = sbr.rel (%p356) target = $region48
      $region47: #{tpu_custom_call.1} parent=5 // pred_region
        // Predicated region
        $region49: #{tpu_custom_call.1} parent=47 // pred_check
          %p359 = pneg %p58
        $region50: #{tpu_custom_call.1} parent=47 // pred_check_branch
          %361 = sbr.rel (%p359) target = $region52
        $region51: #{tpu_custom_call.1} parent=47 // pred_region
          %p362 = scmp.lt.s32.totalorder %s31, 1
          %s363 = scalar_select %p362, %s31, 1
          %p364 = scmp.lt.s32.totalorder %s32, 0
          %s365 = scalar_select %p364, %s32, 0
          %s366 = sadd.s32 %s365, %s363
          %s367 = smul.addr %s366, 8
          %s368 = scalar_lea.vmem %s0, %s367
        $region52: #{tpu_custom_call.1} parent=47 // pred_fallthru
          _
      $region48: #{tpu_custom_call.1} parent=5 // pred_fallthru
        _
      %p369 = scmp.le.s32.totalorder 1, %s24
      %p370 = scmp.lt.s32.totalorder %s24, 3
      %p371 = pnand %p369, %p370
      %p372 = pneg %p371
      // Predicated region
      $region53: #{tpu_custom_call.1} parent=5 // pred_check
        _
      $region54: #{tpu_custom_call.1} parent=5 // pred_check_branch
        %374 = sbr.rel (%p371) target = $region56
      $region55: #{tpu_custom_call.1} parent=5 // pred_region
        %s375 = ssub.s32 %s24, 1
        %p376 = scmp.lt.s32.totalorder %s33, 1
        %s377 = scalar_select %p376, %s33, 1
        %p378 = scmp.lt.s32.totalorder %s34, 0
        %s379 = scalar_select %p378, %s34, 0
        %s380 = sadd.s32 %s379, %s377
        %s381 = smul.addr %s380, 8
        %s382 = scalar_lea.vmem %s0, %s381
        %p383 = pneg %p64
        %p384 = pneg %p61
        %p385 = pneg %p85
        %p386 = pneg %p82
        %p387 = pneg %p106
        %p388 = pneg %p103
        %p389 = pneg %p127
        %p390 = pneg %p124
        %p391 = pneg %p148
        %p392 = pneg %p145
        %p393 = pneg %p169
        %p394 = pneg %p166
        %p395 = pneg %p190
        %p396 = pneg %p187
        %p397 = pneg %p211
        %p398 = pneg %p208
        %p399 = pneg %p232
        %p400 = pneg %p229
        %p401 = pneg %p260
        %p402 = pneg %p257
        %s403 = sand.u32 %s247, 1
        %s404 = scalar_lea.sflag [#allocation3], %s403
        %s405 = sand.u32 %s247, 1
        %s406 = smul.addr %s405, 16
        %s407 = scalar_lea.vmem [#allocation2], %s406
        %p408 = pneg %p288
        %p409 = pneg %p285
        %s410 = sand.u32 %s29, 1
        %s411 = scalar_lea.sflag [#allocation5], %s410
        %s412 = sand.u32 %s275, 1
        %s413 = smul.addr %s412, 16
        %s414 = scalar_lea.vmem [#allocation4], %s413
        %p415 = pneg %p316
        %p416 = pneg %p313
        %s417 = sand.u32 %s29, 1
        %s418 = scalar_lea.sflag [#allocation5], %s417
        %s419 = sand.u32 %s303, 1
        %s420 = smul.addr %s419, 16
        %s421 = scalar_lea.vmem [#allocation6], %s420
        %p422 = scmp.lt.s32.totalorder %s33, 1
        %s423 = scalar_select %p422, %s33, 1
        %p424 = scmp.lt.s32.totalorder %s34, 0
        %s425 = scalar_select %p424, %s34, 0
        %s426 = sadd.s32 %s425, %s423
        %s427 = smul.addr %s426, 8
        %s428 = scalar_lea.vmem %s0, %s427
        %v430 = vld [vmem:[%s428] sm:$0xff]
        %v431 = vld [vmem:[%s1] sm:$0x1]
        %v432 = vld [vmem:[%s2] sm:$0x1]
        %vm433 = vcmask 261120
        %v434 = vsel %vm433, %v430, 0.0
        %435 = vadd.xlane.f32.xlu0 %v434
        %v436 = vpop.xlane.xlu0 %435
        %v437 = vrcp.pop 32.0
        %v438 = vmul.f32 %v436, %v437
        %v439 = vsub.f32 %v430, %v438
        %v440 = vmul.f32 %v439, %v439
        %v441 = vsel %vm433, %v440, 0.0
        %442 = vadd.xlane.f32.xlu0 %v441
        %v443 = vpop.xlane.xlu0 %442
        %v444 = vmul.f32 %v443, %v437
        %v445 = vadd.f32 %v444, 1e-05
        %v446 = vrsqrt.pop %v445
        %v447 = vmul.f32 %v439, %v446
        %v449 = vlaneseq
        %v450 = vshrl.u32 %v449, 7
        %v451 = vsub.s32 0, %v450
        %v452 = vrot.slane %v431, %v451
        %v454 = vmul.f32 %v447, %v452
        %v456 = vlaneseq
        %v457 = vshrl.u32 %v456, 7
        %v458 = vsub.s32 0, %v457
        %v459 = vrot.slane %v432, %v458
        %v461 = vadd.f32 %v454, %v459
        %v462 = vpack.c.bf16 %v461, %v461
        %v463 = vld [vmem:[%s3] sm:$0xf]
        %v464 = vld [vmem:[%s3 + $0x4] sm:$0xf]
        %v465 = vld [vmem:[%s3 + $0x8] sm:$0xf]
        %v466 = vld [vmem:[%s3 + $0xc] sm:$0xf]
        %v467 = vld [vmem:[%s4] sm:$0x1]
        %v469 = vlaneseq
        %v470 = vshrl.u32 %v469, 7
        %v471 = vsub.s32 0, %v470
        %v472 = vrot.slane %v467, %v471
        %v478 = vunpack.c.l.b16 %v463
        %v479 = vunpack.c.l.b16 %v464
        %v480 = vunpack.c.l.b16 %v465
        %v481 = vunpack.c.l.b16 %v466
        %v482 = vpack.c.b16 %v479, %v478
        %v483 = vpack.c.b16 %v481, %v480
        %v487 = vsel %vm433, %v462, 0
        %489 = vmatprep.subr.bf16.mxu0 0
        %490 = vmatpush1.bf16.msra.mxu0 %v482
        %491 = vmatprep.subr.bf16.mxu0 0
        %492 = vmatpush1.bf16.msra.mxu0 %v483
        %493 = vmatprep.subr.bf16.mxu0 0
        %494 = vmatpush1.bf16.msra.mxu0 0
        %495 = vmatprep.subr.bf16.mxu0 0
        %496 = vmatpush1.bf16.msra.mxu0 0
        %497 = vmatprep.subr.bf16.mxu0 0
        %498 = vmatpush1.bf16.msra.mxu0 0
        %499 = vmatprep.subr.bf16.mxu0 0
        %500 = vmatpush1.bf16.msra.mxu0 0
        %501 = vmatprep.subr.bf16.mxu0 0
        %502 = vmatpush1.bf16.msra.mxu0 0
        %503 = vmatprep.subr.bf16.mxu0 0
        %504 = vmatpush1.bf16.msra.mxu0 0
        %505 = vmatprep.subr.bf16.mxu0 0
        %506 = vmatpush1.bf16.msra.mxu0 0
        %507 = vmatprep.subr.bf16.mxu0 0
        %508 = vmatpush1.bf16.msra.mxu0 0
        %509 = vmatprep.subr.bf16.mxu0 0
        %510 = vmatpush1.bf16.msra.mxu0 0
        %511 = vmatprep.subr.bf16.mxu0 0
        %512 = vmatpush1.bf16.msra.mxu0 0
        %513 = vmatprep.subr.bf16.mxu0 0
        %514 = vmatpush1.bf16.msra.mxu0 0
        %515 = vmatprep.subr.bf16.mxu0 0
        %516 = vmatpush1.bf16.msra.mxu0 0
        %517 = vmatprep.subr.bf16.mxu0 0
        %518 = vmatpush1.bf16.msra.mxu0 0
        %519 = vmatprep.subr.bf16.mxu0 0
        %520 = vmatpush1.bf16.msra.mxu0 0
        %521 = vmatprep.mubr.bf16.mxu0 0
        %522 = vmatmul.mubr.bf16.gmra.mrb[0].mxu0 %v487
        %v523 = vpop.f32.mrb[0].mxu0
        %v524 = vadd.f32 %v472, %v523
        %v525 = vpop.f32.mrb[0].mxu0
        %v526 = vpop.f32.mrb[0].mxu0
        %v527 = vpop.f32.mrb[0].mxu0
        %528 = vdwg.mxu0
        %v529 = vpack.c.bf16 %v524, %v524
        %vm530 = vcmask 60416
        %531 = vst.msk [vmem:[%s407] sm:$0xf] %vm530, %v529
        %v532 = vld [vmem:[%s5] sm:$0xf]
        %v533 = vld [vmem:[%s5 + $0x4] sm:$0xf]
        %v534 = vld [vmem:[%s5 + $0x8] sm:$0xf]
        %v535 = vld [vmem:[%s5 + $0xc] sm:$0xf]
        %v536 = vld [vmem:[%s6] sm:$0x1]
        %v538 = vlaneseq
        %v539 = vshrl.u32 %v538, 7
        %v540 = vsub.s32 0, %v539
        %v541 = vrot.slane %v536, %v540
        %v547 = vunpack.c.l.b16 %v532
        %v548 = vunpack.c.l.b16 %v533
        %v549 = vunpack.c.l.b16 %v534
        %v550 = vunpack.c.l.b16 %v535
        %v551 = vpack.c.b16 %v548, %v547
        %v552 = vpack.c.b16 %v550, %v549
        %555 = vmatprep.subr.bf16.mxu0 0
        %556 = vmatpush1.bf16.msra.mxu0 %v551
        %557 = vmatprep.subr.bf16.mxu0 0
        %558 = vmatpush1.bf16.msra.mxu0 %v552
        %559 = vmatprep.subr.bf16.mxu0 0
        %560 = vmatpush1.bf16.msra.mxu0 0
        %561 = vmatprep.subr.bf16.mxu0 0
        %562 = vmatpush1.bf16.msra.mxu0 0
        %563 = vmatprep.subr.bf16.mxu0 0
        %564 = vmatpush1.bf16.msra.mxu0 0
        %565 = vmatprep.subr.bf16.mxu0 0
        %566 = vmatpush1.bf16.msra.mxu0 0
        %567 = vmatprep.subr.bf16.mxu0 0
        %568 = vmatpush1.bf16.msra.mxu0 0
        %569 = vmatprep.subr.bf16.mxu0 0
        %570 = vmatpush1.bf16.msra.mxu0 0
        %571 = vmatprep.subr.bf16.mxu0 0
        %572 = vmatpush1.bf16.msra.mxu0 0
        %573 = vmatprep.subr.bf16.mxu0 0
        %574 = vmatpush1.bf16.msra.mxu0 0
        %575 = vmatprep.subr.bf16.mxu0 0
        %576 = vmatpush1.bf16.msra.mxu0 0
        %577 = vmatprep.subr.bf16.mxu0 0
        %578 = vmatpush1.bf16.msra.mxu0 0
        %579 = vmatprep.subr.bf16.mxu0 0
        %580 = vmatpush1.bf16.msra.mxu0 0
        %581 = vmatprep.subr.bf16.mxu0 0
        %582 = vmatpush1.bf16.msra.mxu0 0
        %583 = vmatprep.subr.bf16.mxu0 0
        %584 = vmatpush1.bf16.msra.mxu0 0
        %585 = vmatprep.subr.bf16.mxu0 0
        %586 = vmatpush1.bf16.msra.mxu0 0
        %587 = vmatprep.mubr.bf16.mxu0 0
        %588 = vmatmul.mubr.bf16.gmra.mrb[0].mxu0 %v487
        %v589 = vpop.f32.mrb[0].mxu0
        %v590 = vadd.f32 %v541, %v589
        %v591 = vpop.f32.mrb[0].mxu0
        %v592 = vpop.f32.mrb[0].mxu0
        %v593 = vpop.f32.mrb[0].mxu0
        %594 = vdwg.mxu0
        %v595 = vpack.c.bf16 %v590, %v590
        %596 = vst.msk [vmem:[%s414] sm:$0xf] %vm530, %v595
        %v597 = vld [vmem:[%s7] sm:$0xf]
        %v598 = vld [vmem:[%s7 + $0x4] sm:$0xf]
        %v599 = vld [vmem:[%s7 + $0x8] sm:$0xf]
        %v600 = vld [vmem:[%s7 + $0xc] sm:$0xf]
        %v601 = vld [vmem:[%s8] sm:$0x1]
        %v603 = vlaneseq
        %v604 = vshrl.u32 %v603, 7
        %v605 = vsub.s32 0, %v604
        %v606 = vrot.slane %v601, %v605
        %v612 = vunpack.c.l.b16 %v597
        %v613 = vunpack.c.l.b16 %v598
        %v614 = vunpack.c.l.b16 %v599
        %v615 = vunpack.c.l.b16 %v600
        %v616 = vpack.c.b16 %v613, %v612
        %v617 = vpack.c.b16 %v615, %v614
        %620 = vmatprep.subr.bf16.mxu0 0
        %621 = vmatpush1.bf16.msra.mxu0 %v616
        %622 = vmatprep.subr.bf16.mxu0 0
        %623 = vmatpush1.bf16.msra.mxu0 %v617
        %624 = vmatprep.subr.bf16.mxu0 0
        %625 = vmatpush1.bf16.msra.mxu0 0
        %626 = vmatprep.subr.bf16.mxu0 0
        %627 = vmatpush1.bf16.msra.mxu0 0
        %628 = vmatprep.subr.bf16.mxu0 0
        %629 = vmatpush1.bf16.msra.mxu0 0
        %630 = vmatprep.subr.bf16.mxu0 0
        %631 = vmatpush1.bf16.msra.mxu0 0
        %632 = vmatprep.subr.bf16.mxu0 0
        %633 = vmatpush1.bf16.msra.mxu0 0
        %634 = vmatprep.subr.bf16.mxu0 0
        %635 = vmatpush1.bf16.msra.mxu0 0
        %636 = vmatprep.subr.bf16.mxu0 0
        %637 = vmatpush1.bf16.msra.mxu0 0
        %638 = vmatprep.subr.bf16.mxu0 0
        %639 = vmatpush1.bf16.msra.mxu0 0
        %640 = vmatprep.subr.bf16.mxu0 0
        %641 = vmatpush1.bf16.msra.mxu0 0
        %642 = vmatprep.subr.bf16.mxu0 0
        %643 = vmatpush1.bf16.msra.mxu0 0
        %644 = vmatprep.subr.bf16.mxu0 0
        %645 = vmatpush1.bf16.msra.mxu0 0
        %646 = vmatprep.subr.bf16.mxu0 0
        %647 = vmatpush1.bf16.msra.mxu0 0
        %648 = vmatprep.subr.bf16.mxu0 0
        %649 = vmatpush1.bf16.msra.mxu0 0
        %650 = vmatprep.subr.bf16.mxu0 0
        %651 = vmatpush1.bf16.msra.mxu0 0
        %652 = vmatprep.mubr.bf16.mxu0 0
        %653 = vmatmul.mubr.bf16.gmra.mrb[0].mxu0 %v487
        %v654 = vpop.f32.mrb[0].mxu0
        %v655 = vadd.f32 %v606, %v654
        %v656 = vpop.f32.mrb[0].mxu0
        %v657 = vpop.f32.mrb[0].mxu0
        %v658 = vpop.f32.mrb[0].mxu0
        %659 = vdwg.mxu0
        %v660 = vpack.c.bf16 %v655, %v655
        %661 = vst.msk [vmem:[%s421] sm:$0xf] %vm530, %v660
        %s662 = scalar_lea.vmem %s3, 16
        %v663 = vld [vmem:[%s662] sm:$0xf]
        %v664 = vld [vmem:[%s662 + $0x4] sm:$0xf]
        %v665 = vld [vmem:[%s662 + $0x8] sm:$0xf]
        %v666 = vld [vmem:[%s662 + $0xc] sm:$0xf]
        %s667 = scalar_lea.vmem %s4, 1
        %v668 = vld [vmem:[%s667] sm:$0x1]
        %v670 = vlaneseq
        %v671 = vshrl.u32 %v670, 7
        %v672 = vsub.s32 0, %v671
        %v673 = vrot.slane %v668, %v672
        %v679 = vunpack.c.l.b16 %v663
        %v680 = vunpack.c.l.b16 %v664
        %v681 = vunpack.c.l.b16 %v665
        %v682 = vunpack.c.l.b16 %v666
        %v683 = vpack.c.b16 %v680, %v679
        %v684 = vpack.c.b16 %v682, %v681
        %687 = vmatprep.subr.bf16.mxu0 0
        %688 = vmatpush1.bf16.msra.mxu0 %v683
        %689 = vmatprep.subr.bf16.mxu0 0
        %690 = vmatpush1.bf16.msra.mxu0 %v684
        %691 = vmatprep.subr.bf16.mxu0 0
        %692 = vmatpush1.bf16.msra.mxu0 0
        %693 = vmatprep.subr.bf16.mxu0 0
        %694 = vmatpush1.bf16.msra.mxu0 0
        %695 = vmatprep.subr.bf16.mxu0 0
        %696 = vmatpush1.bf16.msra.mxu0 0
        %697 = vmatprep.subr.bf16.mxu0 0
        %698 = vmatpush1.bf16.msra.mxu0 0
        %699 = vmatprep.subr.bf16.mxu0 0
        %700 = vmatpush1.bf16.msra.mxu0 0
        %701 = vmatprep.subr.bf16.mxu0 0
        %702 = vmatpush1.bf16.msra.mxu0 0
        %703 = vmatprep.subr.bf16.mxu0 0
        %704 = vmatpush1.bf16.msra.mxu0 0
        %705 = vmatprep.subr.bf16.mxu0 0
        %706 = vmatpush1.bf16.msra.mxu0 0
        %707 = vmatprep.subr.bf16.mxu0 0
        %708 = vmatpush1.bf16.msra.mxu0 0
        %709 = vmatprep.subr.bf16.mxu0 0
        %710 = vmatpush1.bf16.msra.mxu0 0
        %711 = vmatprep.subr.bf16.mxu0 0
        %712 = vmatpush1.bf16.msra.mxu0 0
        %713 = vmatprep.subr.bf16.mxu0 0
        %714 = vmatpush1.bf16.msra.mxu0 0
        %715 = vmatprep.subr.bf16.mxu0 0
        %716 = vmatpush1.bf16.msra.mxu0 0
        %717 = vmatprep.subr.bf16.mxu0 0
        %718 = vmatpush1.bf16.msra.mxu0 0
        %719 = vmatprep.mubr.bf16.mxu0 0
        %720 = vmatmul.mubr.bf16.gmra.mrb[0].mxu0 %v487
        %v721 = vpop.f32.mrb[0].mxu0
        %v722 = vadd.f32 %v673, %v721
        %v723 = vpop.f32.mrb[0].mxu0
        %v724 = vpop.f32.mrb[0].mxu0
        %v725 = vpop.f32.mrb[0].mxu0
        %726 = vdwg.mxu0
        %v727 = vpack.c.bf16 %v722, %v722
        %s728 = scalar_lea.vmem %s407, 4 [#allocation2]
        %729 = vst.msk [vmem:[%s728] sm:$0xf] %vm530, %v727
        %s730 = scalar_lea.vmem %s5, 16
        %v731 = vld [vmem:[%s730] sm:$0xf]
        %v732 = vld [vmem:[%s730 + $0x4] sm:$0xf]
        %v733 = vld [vmem:[%s730 + $0x8] sm:$0xf]
        %v734 = vld [vmem:[%s730 + $0xc] sm:$0xf]
        %s735 = scalar_lea.vmem %s6, 1
        %v736 = vld [vmem:[%s735] sm:$0x1]
        %v738 = vlaneseq
        %v739 = vshrl.u32 %v738, 7
        %v740 = vsub.s32 0, %v739
        %v741 = vrot.slane %v736, %v740
        %v747 = vunpack.c.l.b16 %v731
        %v748 = vunpack.c.l.b16 %v732
        %v749 = vunpack.c.l.b16 %v733
        %v750 = vunpack.c.l.b16 %v734
        %v751 = vpack.c.b16 %v748, %v747
        %v752 = vpack.c.b16 %v750, %v749
        %755 = vmatprep.subr.bf16.mxu0 0
        %756 = vmatpush1.bf16.msra.mxu0 %v751
        %757 = vmatprep.subr.bf16.mxu0 0
        %758 = vmatpush1.bf16.msra.mxu0 %v752
        %759 = vmatprep.subr.bf16.mxu0 0
        %760 = vmatpush1.bf16.msra.mxu0 0
        %761 = vmatprep.subr.bf16.mxu0 0
        %762 = vmatpush1.bf16.msra.mxu0 0
        %763 = vmatprep.subr.bf16.mxu0 0
        %764 = vmatpush1.bf16.msra.mxu0 0
        %765 = vmatprep.subr.bf16.mxu0 0
        %766 = vmatpush1.bf16.msra.mxu0 0
        %767 = vmatprep.subr.bf16.mxu0 0
        %768 = vmatpush1.bf16.msra.mxu0 0
        %769 = vmatprep.subr.bf16.mxu0 0
        %770 = vmatpush1.bf16.msra.mxu0 0
        %771 = vmatprep.subr.bf16.mxu0 0
        %772 = vmatpush1.bf16.msra.mxu0 0
        %773 = vmatprep.subr.bf16.mxu0 0
        %774 = vmatpush1.bf16.msra.mxu0 0
        %775 = vmatprep.subr.bf16.mxu0 0
        %776 = vmatpush1.bf16.msra.mxu0 0
        %777 = vmatprep.subr.bf16.mxu0 0
        %778 = vmatpush1.bf16.msra.mxu0 0
        %779 = vmatprep.subr.bf16.mxu0 0
        %780 = vmatpush1.bf16.msra.mxu0 0
        %781 = vmatprep.subr.bf16.mxu0 0
        %782 = vmatpush1.bf16.msra.mxu0 0
        %783 = vmatprep.subr.bf16.mxu0 0
        %784 = vmatpush1.bf16.msra.mxu0 0
        %785 = vmatprep.subr.bf16.mxu0 0
        %786 = vmatpush1.bf16.msra.mxu0 0
        %787 = vmatprep.mubr.bf16.mxu0 0
        %788 = vmatmul.mubr.bf16.gmra.mrb[0].mxu0 %v487
        %v789 = vpop.f32.mrb[0].mxu0
        %v790 = vadd.f32 %v741, %v789
        %v791 = vpop.f32.mrb[0].mxu0
        %v792 = vpop.f32.mrb[0].mxu0
        %v793 = vpop.f32.mrb[0].mxu0
        %794 = vdwg.mxu0
        %v795 = vpack.c.bf16 %v790, %v790
        %s796 = scalar_lea.vmem %s414, 4 [#allocation4]
        %797 = vst.msk [vmem:[%s796] sm:$0xf] %vm530, %v795
        %s798 = scalar_lea.vmem %s7, 16
        %v799 = vld [vmem:[%s798] sm:$0xf]
        %v800 = vld [vmem:[%s798 + $0x4] sm:$0xf]
        %v801 = vld [vmem:[%s798 + $0x8] sm:$0xf]
        %v802 = vld [vmem:[%s798 + $0xc] sm:$0xf]
        %s803 = scalar_lea.vmem %s8, 1
        %v804 = vld [vmem:[%s803] sm:$0x1]
        %v806 = vlaneseq
        %v807 = vshrl.u32 %v806, 7
        %v808 = vsub.s32 0, %v807
        %v809 = vrot.slane %v804, %v808
        %v815 = vunpack.c.l.b16 %v799
        %v816 = vunpack.c.l.b16 %v800
        %v817 = vunpack.c.l.b16 %v801
        %v818 = vunpack.c.l.b16 %v802
        %v819 = vpack.c.b16 %v816, %v815
        %v820 = vpack.c.b16 %v818, %v817
        %823 = vmatprep.subr.bf16.mxu0 0
        %824 = vmatpush1.bf16.msra.mxu0 %v819
        %825 = vmatprep.subr.bf16.mxu0 0
        %826 = vmatpush1.bf16.msra.mxu0 %v820
        %827 = vmatprep.subr.bf16.mxu0 0
        %828 = vmatpush1.bf16.msra.mxu0 0
        %829 = vmatprep.subr.bf16.mxu0 0
        %830 = vmatpush1.bf16.msra.mxu0 0
        %831 = vmatprep.subr.bf16.mxu0 0
        %832 = vmatpush1.bf16.msra.mxu0 0
        %833 = vmatprep.subr.bf16.mxu0 0
        %834 = vmatpush1.bf16.msra.mxu0 0
        %835 = vmatprep.subr.bf16.mxu0 0
        %836 = vmatpush1.bf16.msra.mxu0 0
        %837 = vmatprep.subr.bf16.mxu0 0
        %838 = vmatpush1.bf16.msra.mxu0 0
        %839 = vmatprep.subr.bf16.mxu0 0
        %840 = vmatpush1.bf16.msra.mxu0 0
        %841 = vmatprep.subr.bf16.mxu0 0
        %842 = vmatpush1.bf16.msra.mxu0 0
        %843 = vmatprep.subr.bf16.mxu0 0
        %844 = vmatpush1.bf16.msra.mxu0 0
        %845 = vmatprep.subr.bf16.mxu0 0
        %846 = vmatpush1.bf16.msra.mxu0 0
        %847 = vmatprep.subr.bf16.mxu0 0
        %848 = vmatpush1.bf16.msra.mxu0 0
        %849 = vmatprep.subr.bf16.mxu0 0
        %850 = vmatpush1.bf16.msra.mxu0 0
        %851 = vmatprep.subr.bf16.mxu0 0
        %852 = vmatpush1.bf16.msra.mxu0 0
        %853 = vmatprep.subr.bf16.mxu0 0
        %854 = vmatpush1.bf16.msra.mxu0 0
        %855 = vmatprep.mubr.bf16.mxu0 0
        %856 = vmatmul.mubr.bf16.gmra.mrb[0].mxu0 %v487
        %v857 = vpop.f32.mrb[0].mxu0
        %v858 = vadd.f32 %v809, %v857
        %v859 = vpop.f32.mrb[0].mxu0
        %v860 = vpop.f32.mrb[0].mxu0
        %v861 = vpop.f32.mrb[0].mxu0
        %862 = vdwg.mxu0
        %v863 = vpack.c.bf16 %v858, %v858
        %s864 = scalar_lea.vmem %s421, 4 [#allocation6]
        %865 = vst.msk [vmem:[%s864] sm:$0xf] %vm530, %v863
        %s866 = scalar_lea.vmem %s3, 32
        %v867 = vld [vmem:[%s866] sm:$0xf]
        %v868 = vld [vmem:[%s866 + $0x4] sm:$0xf]
        %v869 = vld [vmem:[%s866 + $0x8] sm:$0xf]
        %v870 = vld [vmem:[%s866 + $0xc] sm:$0xf]
        %s871 = scalar_lea.vmem %s4, 2
        %v872 = vld [vmem:[%s871] sm:$0x1]
        %v874 = vlaneseq
        %v875 = vshrl.u32 %v874, 7
        %v876 = vsub.s32 0, %v875
        %v877 = vrot.slane %v872, %v876
        %v883 = vunpack.c.l.b16 %v867
        %v884 = vunpack.c.l.b16 %v868
        %v885 = vunpack.c.l.b16 %v869
        %v886 = vunpack.c.l.b16 %v870
        %v887 = vpack.c.b16 %v884, %v883
        %v888 = vpack.c.b16 %v886, %v885
        %891 = vmatprep.subr.bf16.mxu0 0
        %892 = vmatpush1.bf16.msra.mxu0 %v887
        %893 = vmatprep.subr.bf16.mxu0 0
        %894 = vmatpush1.bf16.msra.mxu0 %v888
        %895 = vmatprep.subr.bf16.mxu0 0
        %896 = vmatpush1.bf16.msra.mxu0 0
        %897 = vmatprep.subr.bf16.mxu0 0
        %898 = vmatpush1.bf16.msra.mxu0 0
        %899 = vmatprep.subr.bf16.mxu0 0
        %900 = vmatpush1.bf16.msra.mxu0 0
        %901 = vmatprep.subr.bf16.mxu0 0
        %902 = vmatpush1.bf16.msra.mxu0 0
        %903 = vmatprep.subr.bf16.mxu0 0
        %904 = vmatpush1.bf16.msra.mxu0 0
        %905 = vmatprep.subr.bf16.mxu0 0
        %906 = vmatpush1.bf16.msra.mxu0 0
        %907 = vmatprep.subr.bf16.mxu0 0
        %908 = vmatpush1.bf16.msra.mxu0 0
        %909 = vmatprep.subr.bf16.mxu0 0
        %910 = vmatpush1.bf16.msra.mxu0 0
        %911 = vmatprep.subr.bf16.mxu0 0
        %912 = vmatpush1.bf16.msra.mxu0 0
        %913 = vmatprep.subr.bf16.mxu0 0
        %914 = vmatpush1.bf16.msra.mxu0 0
        %915 = vmatprep.subr.bf16.mxu0 0
        %916 = vmatpush1.bf16.msra.mxu0 0
        %917 = vmatprep.subr.bf16.mxu0 0
        %918 = vmatpush1.bf16.msra.mxu0 0
        %919 = vmatprep.subr.bf16.mxu0 0
        %920 = vmatpush1.bf16.msra.mxu0 0
        %921 = vmatprep.subr.bf16.mxu0 0
        %922 = vmatpush1.bf16.msra.mxu0 0
        %923 = vmatprep.mubr.bf16.mxu0 0
        %924 = vmatmul.mubr.bf16.gmra.mrb[0].mxu0 %v487
        %v925 = vpop.f32.mrb[0].mxu0
        %v926 = vadd.f32 %v877, %v925
        %v927 = vpop.f32.mrb[0].mxu0
        %v928 = vpop.f32.mrb[0].mxu0
        %v929 = vpop.f32.mrb[0].mxu0
        %930 = vdwg.mxu0
        %v931 = vpack.c.bf16 %v926, %v926
        %s932 = scalar_lea.vmem %s407, 8 [#allocation2]
        %933 = vst.msk [vmem:[%s932] sm:$0xf] %vm530, %v931
        %s934 = scalar_lea.vmem %s5, 32
        %v935 = vld [vmem:[%s934] sm:$0xf]
        %v936 = vld [vmem:[%s934 + $0x4] sm:$0xf]
        %v937 = vld [vmem:[%s934 + $0x8] sm:$0xf]
        %v938 = vld [vmem:[%s934 + $0xc] sm:$0xf]
        %s939 = scalar_lea.vmem %s6, 2
        %v940 = vld [vmem:[%s939] sm:$0x1]
        %v942 = vlaneseq
        %v943 = vshrl.u32 %v942, 7
        %v944 = vsub.s32 0, %v943
        %v945 = vrot.slane %v940, %v944
        %v951 = vunpack.c.l.b16 %v935
        %v952 = vunpack.c.l.b16 %v936
        %v953 = vunpack.c.l.b16 %v937
        %v954 = vunpack.c.l.b16 %v938
        %v955 = vpack.c.b16 %v952, %v951
        %v956 = vpack.c.b16 %v954, %v953
        %959 = vmatprep.subr.bf16.mxu0 0
        %960 = vmatpush1.bf16.msra.mxu0 %v955
        %961 = vmatprep.subr.bf16.mxu0 0
        %962 = vmatpush1.bf16.msra.mxu0 %v956
        %963 = vmatprep.subr.bf16.mxu0 0
        %964 = vmatpush1.bf16.msra.mxu0 0
        %965 = vmatprep.subr.bf16.mxu0 0
        %966 = vmatpush1.bf16.msra.mxu0 0
        %967 = vmatprep.subr.bf16.mxu0 0
        %968 = vmatpush1.bf16.msra.mxu0 0
        %969 = vmatprep.subr.bf16.mxu0 0
        %970 = vmatpush1.bf16.msra.mxu0 0
        %971 = vmatprep.subr.bf16.mxu0 0
        %972 = vmatpush1.bf16.msra.mxu0 0
        %973 = vmatprep.subr.bf16.mxu0 0
        %974 = vmatpush1.bf16.msra.mxu0 0
        %975 = vmatprep.subr.bf16.mxu0 0
        %976 = vmatpush1.bf16.msra.mxu0 0
        %977 = vmatprep.subr.bf16.mxu0 0
        %978 = vmatpush1.bf16.msra.mxu0 0
        %979 = vmatprep.subr.bf16.mxu0 0
        %980 = vmatpush1.bf16.msra.mxu0 0
        %981 = vmatprep.subr.bf16.mxu0 0
        %982 = vmatpush1.bf16.msra.mxu0 0
        %983 = vmatprep.subr.bf16.mxu0 0
        %984 = vmatpush1.bf16.msra.mxu0 0
        %985 = vmatprep.subr.bf16.mxu0 0
        %986 = vmatpush1.bf16.msra.mxu0 0
        %987 = vmatprep.subr.bf16.mxu0 0
        %988 = vmatpush1.bf16.msra.mxu0 0
        %989 = vmatprep.subr.bf16.mxu0 0
        %990 = vmatpush1.bf16.msra.mxu0 0
        %991 = vmatprep.mubr.bf16.mxu0 0
        %992 = vmatmul.mubr.bf16.gmra.mrb[0].mxu0 %v487
        %v993 = vpop.f32.mrb[0].mxu0
        %v994 = vadd.f32 %v945, %v993
        %v995 = vpop.f32.mrb[0].mxu0
        %v996 = vpop.f32.mrb[0].mxu0
        %v997 = vpop.f32.mrb[0].mxu0
        %998 = vdwg.mxu0
        %v999 = vpack.c.bf16 %v994, %v994
        %s1000 = scalar_lea.vmem %s414, 8 [#allocation4]
        %1001 = vst.msk [vmem:[%s1000] sm:$0xf] %vm530, %v999
        %s1002 = scalar_lea.vmem %s7, 32
        %v1003 = vld [vmem:[%s1002] sm:$0xf]
        %v1004 = vld [vmem:[%s1002 + $0x4] sm:$0xf]
        %v1005 = vld [vmem:[%s1002 + $0x8] sm:$0xf]
        %v1006 = vld [vmem:[%s1002 + $0xc] sm:$0xf]
        %s1007 = scalar_lea.vmem %s8, 2
        %v1008 = vld [vmem:[%s1007] sm:$0x1]
        %v1010 = vlaneseq
        %v1011 = vshrl.u32 %v1010, 7
        %v1012 = vsub.s32 0, %v1011
        %v1013 = vrot.slane %v1008, %v1012
        %v1019 = vunpack.c.l.b16 %v1003
        %v1020 = vunpack.c.l.b16 %v1004
        %v1021 = vunpack.c.l.b16 %v1005
        %v1022 = vunpack.c.l.b16 %v1006
        %v1023 = vpack.c.b16 %v1020, %v1019
        %v1024 = vpack.c.b16 %v1022, %v1021
        %1027 = vmatprep.subr.bf16.mxu0 0
        %1028 = vmatpush1.bf16.msra.mxu0 %v1023
        %1029 = vmatprep.subr.bf16.mxu0 0
        %1030 = vmatpush1.bf16.msra.mxu0 %v1024
        %1031 = vmatprep.subr.bf16.mxu0 0
        %1032 = vmatpush1.bf16.msra.mxu0 0
        %1033 = vmatprep.subr.bf16.mxu0 0
        %1034 = vmatpush1.bf16.msra.mxu0 0
        %1035 = vmatprep.subr.bf16.mxu0 0
        %1036 = vmatpush1.bf16.msra.mxu0 0
        %1037 = vmatprep.subr.bf16.mxu0 0
        %1038 = vmatpush1.bf16.msra.mxu0 0
        %1039 = vmatprep.subr.bf16.mxu0 0
        %1040 = vmatpush1.bf16.msra.mxu0 0
        %1041 = vmatprep.subr.bf16.mxu0 0
        %1042 = vmatpush1.bf16.msra.mxu0 0
        %1043 = vmatprep.subr.bf16.mxu0 0
        %1044 = vmatpush1.bf16.msra.mxu0 0
        %1045 = vmatprep.subr.bf16.mxu0 0
        %1046 = vmatpush1.bf16.msra.mxu0 0
        %1047 = vmatprep.subr.bf16.mxu0 0
        %1048 = vmatpush1.bf16.msra.mxu0 0
        %1049 = vmatprep.subr.bf16.mxu0 0
        %1050 = vmatpush1.bf16.msra.mxu0 0
        %1051 = vmatprep.subr.bf16.mxu0 0
        %1052 = vmatpush1.bf16.msra.mxu0 0
        %1053 = vmatprep.subr.bf16.mxu0 0
        %1054 = vmatpush1.bf16.msra.mxu0 0
        %1055 = vmatprep.subr.bf16.mxu0 0
        %1056 = vmatpush1.bf16.msra.mxu0 0
        %1057 = vmatprep.subr.bf16.mxu0 0
        %1058 = vmatpush1.bf16.msra.mxu0 0
        %1059 = vmatprep.mubr.bf16.mxu0 0
        %1060 = vmatmul.mubr.bf16.gmra.mrb[0].mxu0 %v487
        %v1061 = vpop.f32.mrb[0].mxu0
        %v1062 = vadd.f32 %v1013, %v1061
        %v1063 = vpop.f32.mrb[0].mxu0
        %v1064 = vpop.f32.mrb[0].mxu0
        %v1065 = vpop.f32.mrb[0].mxu0
        %1066 = vdwg.mxu0
        %v1067 = vpack.c.bf16 %v1062, %v1062
        %s1068 = scalar_lea.vmem %s421, 8 [#allocation6]
        %1069 = vst.msk [vmem:[%s1068] sm:$0xf] %vm530, %v1067
        %s1070 = scalar_lea.vmem %s3, 48
        %v1071 = vld [vmem:[%s1070] sm:$0xf]
        %v1072 = vld [vmem:[%s1070 + $0x4] sm:$0xf]
        %v1073 = vld [vmem:[%s1070 + $0x8] sm:$0xf]
        %v1074 = vld [vmem:[%s1070 + $0xc] sm:$0xf]
        %s1075 = scalar_lea.vmem %s4, 3
        %v1076 = vld [vmem:[%s1075] sm:$0x1]
        %v1078 = vlaneseq
        %v1079 = vshrl.u32 %v1078, 7
        %v1080 = vsub.s32 0, %v1079
        %v1081 = vrot.slane %v1076, %v1080
        %v1087 = vunpack.c.l.b16 %v1071
        %v1088 = vunpack.c.l.b16 %v1072
        %v1089 = vunpack.c.l.b16 %v1073
        %v1090 = vunpack.c.l.b16 %v1074
        %v1091 = vpack.c.b16 %v1088, %v1087
        %v1092 = vpack.c.b16 %v1090, %v1089
        %1095 = vmatprep.subr.bf16.mxu0 0
        %1096 = vmatpush1.bf16.msra.mxu0 %v1091
        %1097 = vmatprep.subr.bf16.mxu0 0
        %1098 = vmatpush1.bf16.msra.mxu0 %v1092
        %1099 = vmatprep.subr.bf16.mxu0 0
        %1100 = vmatpush1.bf16.msra.mxu0 0
        %1101 = vmatprep.subr.bf16.mxu0 0
        %1102 = vmatpush1.bf16.msra.mxu0 0
        %1103 = vmatprep.subr.bf16.mxu0 0
        %1104 = vmatpush1.bf16.msra.mxu0 0
        %1105 = vmatprep.subr.bf16.mxu0 0
        %1106 = vmatpush1.bf16.msra.mxu0 0
        %1107 = vmatprep.subr.bf16.mxu0 0
        %1108 = vmatpush1.bf16.msra.mxu0 0
        %1109 = vmatprep.subr.bf16.mxu0 0
        %1110 = vmatpush1.bf16.msra.mxu0 0
        %1111 = vmatprep.subr.bf16.mxu0 0
        %1112 = vmatpush1.bf16.msra.mxu0 0
        %1113 = vmatprep.subr.bf16.mxu0 0
        %1114 = vmatpush1.bf16.msra.mxu0 0
        %1115 = vmatprep.subr.bf16.mxu0 0
        %1116 = vmatpush1.bf16.msra.mxu0 0
        %1117 = vmatprep.subr.bf16.mxu0 0
        %1118 = vmatpush1.bf16.msra.mxu0 0
        %1119 = vmatprep.subr.bf16.mxu0 0
        %1120 = vmatpush1.bf16.msra.mxu0 0
        %1121 = vmatprep.subr.bf16.mxu0 0
        %1122 = vmatpush1.bf16.msra.mxu0 0
        %1123 = vmatprep.subr.bf16.mxu0 0
        %1124 = vmatpush1.bf16.msra.mxu0 0
        %1125 = vmatprep.subr.bf16.mxu0 0
        %1126 = vmatpush1.bf16.msra.mxu0 0
        %1127 = vmatprep.mubr.bf16.mxu0 0
        %1128 = vmatmul.mubr.bf16.gmra.mrb[0].mxu0 %v487
        %v1129 = vpop.f32.mrb[0].mxu0
        %v1130 = vadd.f32 %v1081, %v1129
        %v1131 = vpop.f32.mrb[0].mxu0
        %v1132 = vpop.f32.mrb[0].mxu0
        %v1133 = vpop.f32.mrb[0].mxu0
        %1134 = vdwg.mxu0
        %v1135 = vpack.c.bf16 %v1130, %v1130
        %s1136 = scalar_lea.vmem %s407, 12 [#allocation2]
        %1137 = vst.msk [vmem:[%s1136] sm:$0xf] %vm530, %v1135
        %s1138 = scalar_lea.vmem %s5, 48
        %v1139 = vld [vmem:[%s1138] sm:$0xf]
        %v1140 = vld [vmem:[%s1138 + $0x4] sm:$0xf]
        %v1141 = vld [vmem:[%s1138 + $0x8] sm:$0xf]
        %v1142 = vld [vmem:[%s1138 + $0xc] sm:$0xf]
        %s1143 = scalar_lea.vmem %s6, 3
        %v1144 = vld [vmem:[%s1143] sm:$0x1]
        %v1146 = vlaneseq
        %v1147 = vshrl.u32 %v1146, 7
        %v1148 = vsub.s32 0, %v1147
        %v1149 = vrot.slane %v1144, %v1148
        %v1155 = vunpack.c.l.b16 %v1139
        %v1156 = vunpack.c.l.b16 %v1140
        %v1157 = vunpack.c.l.b16 %v1141
        %v1158 = vunpack.c.l.b16 %v1142
        %v1159 = vpack.c.b16 %v1156, %v1155
        %v1160 = vpack.c.b16 %v1158, %v1157
        %1163 = vmatprep.subr.bf16.mxu0 0
        %1164 = vmatpush1.bf16.msra.mxu0 %v1159
        %1165 = vmatprep.subr.bf16.mxu0 0
        %1166 = vmatpush1.bf16.msra.mxu0 %v1160
        %1167 = vmatprep.subr.bf16.mxu0 0
        %1168 = vmatpush1.bf16.msra.mxu0 0
        %1169 = vmatprep.subr.bf16.mxu0 0
        %1170 = vmatpush1.bf16.msra.mxu0 0
        %1171 = vmatprep.subr.bf16.mxu0 0
        %1172 = vmatpush1.bf16.msra.mxu0 0
        %1173 = vmatprep.subr.bf16.mxu0 0
        %1174 = vmatpush1.bf16.msra.mxu0 0
        %1175 = vmatprep.subr.bf16.mxu0 0
        %1176 = vmatpush1.bf16.msra.mxu0 0
        %1177 = vmatprep.subr.bf16.mxu0 0
        %1178 = vmatpush1.bf16.msra.mxu0 0
        %1179 = vmatprep.subr.bf16.mxu0 0
        %1180 = vmatpush1.bf16.msra.mxu0 0
        %1181 = vmatprep.subr.bf16.mxu0 0
        %1182 = vmatpush1.bf16.msra.mxu0 0
        %1183 = vmatprep.subr.bf16.mxu0 0
        %1184 = vmatpush1.bf16.msra.mxu0 0
        %1185 = vmatprep.subr.bf16.mxu0 0
        %1186 = vmatpush1.bf16.msra.mxu0 0
        %1187 = vmatprep.subr.bf16.mxu0 0
        %1188 = vmatpush1.bf16.msra.mxu0 0
        %1189 = vmatprep.subr.bf16.mxu0 0
        %1190 = vmatpush1.bf16.msra.mxu0 0
        %1191 = vmatprep.subr.bf16.mxu0 0
        %1192 = vmatpush1.bf16.msra.mxu0 0
        %1193 = vmatprep.subr.bf16.mxu0 0
        %1194 = vmatpush1.bf16.msra.mxu0 0
        %1195 = vmatprep.mubr.bf16.mxu0 0
        %1196 = vmatmul.mubr.bf16.gmra.mrb[0].mxu0 %v487
        %v1197 = vpop.f32.mrb[0].mxu0
        %v1198 = vadd.f32 %v1149, %v1197
        %v1199 = vpop.f32.mrb[0].mxu0
        %v1200 = vpop.f32.mrb[0].mxu0
        %v1201 = vpop.f32.mrb[0].mxu0
        %1202 = vdwg.mxu0
        %v1203 = vpack.c.bf16 %v1198, %v1198
        %s1204 = scalar_lea.vmem %s414, 12 [#allocation4]
        %1205 = vst.msk [vmem:[%s1204] sm:$0xf] %vm530, %v1203
        %s1206 = scalar_lea.vmem %s7, 48
        %v1207 = vld [vmem:[%s1206] sm:$0xf]
        %v1208 = vld [vmem:[%s1206 + $0x4] sm:$0xf]
        %v1209 = vld [vmem:[%s1206 + $0x8] sm:$0xf]
        %v1210 = vld [vmem:[%s1206 + $0xc] sm:$0xf]
        %s1211 = scalar_lea.vmem %s8, 3
        %v1212 = vld [vmem:[%s1211] sm:$0x1]
        %v1214 = vlaneseq
        %v1215 = vshrl.u32 %v1214, 7
        %v1216 = vsub.s32 0, %v1215
        %v1217 = vrot.slane %v1212, %v1216
        %v1223 = vunpack.c.l.b16 %v1207
        %v1224 = vunpack.c.l.b16 %v1208
        %v1225 = vunpack.c.l.b16 %v1209
        %v1226 = vunpack.c.l.b16 %v1210
        %v1227 = vpack.c.b16 %v1224, %v1223
        %v1228 = vpack.c.b16 %v1226, %v1225
        %1231 = vmatprep.subr.bf16.mxu0 0
        %1232 = vmatpush1.bf16.msra.mxu0 %v1227
        %1233 = vmatprep.subr.bf16.mxu0 0
        %1234 = vmatpush1.bf16.msra.mxu0 %v1228
        %1235 = vmatprep.subr.bf16.mxu0 0
        %1236 = vmatpush1.bf16.msra.mxu0 0
        %1237 = vmatprep.subr.bf16.mxu0 0
        %1238 = vmatpush1.bf16.msra.mxu0 0
        %1239 = vmatprep.subr.bf16.mxu0 0
        %1240 = vmatpush1.bf16.msra.mxu0 0
        %1241 = vmatprep.subr.bf16.mxu0 0
        %1242 = vmatpush1.bf16.msra.mxu0 0
        %1243 = vmatprep.subr.bf16.mxu0 0
        %1244 = vmatpush1.bf16.msra.mxu0 0
        %1245 = vmatprep.subr.bf16.mxu0 0
        %1246 = vmatpush1.bf16.msra.mxu0 0
        %1247 = vmatprep.subr.bf16.mxu0 0
        %1248 = vmatpush1.bf16.msra.mxu0 0
        %1249 = vmatprep.subr.bf16.mxu0 0
        %1250 = vmatpush1.bf16.msra.mxu0 0
        %1251 = vmatprep.subr.bf16.mxu0 0
        %1252 = vmatpush1.bf16.msra.mxu0 0
        %1253 = vmatprep.subr.bf16.mxu0 0
        %1254 = vmatpush1.bf16.msra.mxu0 0
        %1255 = vmatprep.subr.bf16.mxu0 0
        %1256 = vmatpush1.bf16.msra.mxu0 0
        %1257 = vmatprep.subr.bf16.mxu0 0
        %1258 = vmatpush1.bf16.msra.mxu0 0
        %1259 = vmatprep.subr.bf16.mxu0 0
        %1260 = vmatpush1.bf16.msra.mxu0 0
        %1261 = vmatprep.subr.bf16.mxu0 0
        %1262 = vmatpush1.bf16.msra.mxu0 0
        %1263 = vmatprep.mubr.bf16.mxu0 0
        %1264 = vmatmul.mubr.bf16.gmra.mrb[0].mxu0 %v487
        %v1265 = vpop.f32.mrb[0].mxu0
        %v1266 = vadd.f32 %v1217, %v1265
        %v1267 = vpop.f32.mrb[0].mxu0
        %v1268 = vpop.f32.mrb[0].mxu0
        %v1269 = vpop.f32.mrb[0].mxu0
        %1270 = vdwg.mxu0
        %v1271 = vpack.c.bf16 %v1266, %v1266
        %s1272 = scalar_lea.vmem %s421, 12 [#allocation6]
        %1273 = vst.msk [vmem:[%s1272] sm:$0xf] %vm530, %v1271
        %s1274 = sand.u32 %s247, 1
        %s1275 = scalar_lea.sflag [#allocation3], %s1274
        %s1276 = sand.u32 %s247, 1
        %s1277 = smul.addr %s1276, 16
        %s1278 = scalar_lea.vmem [#allocation2], %s1277
        %s1279 = sand.u32 %s29, 1
        %s1280 = scalar_lea.sflag [#allocation5], %s1279
        %s1281 = sand.u32 %s275, 1
        %s1282 = smul.addr %s1281, 16
        %s1283 = scalar_lea.vmem [#allocation4], %s1282
        %s1284 = sand.u32 %s29, 1
        %s1285 = scalar_lea.sflag [#allocation5], %s1284
        %s1286 = sand.u32 %s303, 1
        %s1287 = smul.addr %s1286, 16
        %s1288 = scalar_lea.vmem [#allocation6], %s1287
        // Predicated region
        $region57: #{tpu_custom_call.1} parent=55 // pred_check
          %p1289 = pneg %p257
        $region58: #{tpu_custom_call.1} parent=55 // pred_check_branch
          %1291 = sbr.rel (%p1289) target = $region60
        $region59: #{tpu_custom_call.1} parent=55 // pred_region
          %s1293 = ssub.s32 256, 256
          %1294 = vsyncadd %s1275, %s1293
          %s1295 = smul.addr %s33, 4
          %s1296 = sadd.s32 %s34, %s1295
          %s1297 = smul.addr %s1296, 64
          %s1298 = scalar_lea.hbm %s9, %s1297
          %s1299 = sshll.u32 %s1278, 4
          %s1300 = int_to_ptr.vmem [resolvable:$true] %s1299
          %1305 = dma.vmem_to_hbm [thread:$0]  %s1300, 256, %s1298, %s1275, 64, 64, 4
        $region60: #{tpu_custom_call.1} parent=55 // pred_fallthru
          _
        // Predicated region
        $region61: #{tpu_custom_call.1} parent=55 // pred_check
          %p1306 = pneg %p285
        $region62: #{tpu_custom_call.1} parent=55 // pred_check_branch
          %1308 = sbr.rel (%p1306) target = $region64
        $region63: #{tpu_custom_call.1} parent=55 // pred_region
          %s1310 = ssub.s32 256, 256
          %1311 = vsyncadd %s1280, %s1310
          %s1312 = smul.addr %s33, 4
          %s1313 = sadd.s32 %s34, %s1312
          %s1314 = smul.addr %s1313, 64
          %s1315 = scalar_lea.hbm %s10, %s1314
          %s1316 = sshll.u32 %s1283, 4
          %s1317 = int_to_ptr.vmem [resolvable:$true] %s1316
          %1322 = dma.vmem_to_hbm [thread:$0]  %s1317, 256, %s1315, %s1280, 64, 64, 4
        $region64: #{tpu_custom_call.1} parent=55 // pred_fallthru
          _
        // Predicated region
        $region65: #{tpu_custom_call.1} parent=55 // pred_check
          %p1323 = pneg %p313
        $region66: #{tpu_custom_call.1} parent=55 // pred_check_branch
          %1325 = sbr.rel (%p1323) target = $region68
        $region67: #{tpu_custom_call.1} parent=55 // pred_region
          %s1327 = ssub.s32 256, 256
          %1328 = vsyncadd %s1285, %s1327
          %s1329 = smul.addr %s33, 4
          %s1330 = sadd.s32 %s34, %s1329
          %s1331 = smul.addr %s1330, 64
          %s1332 = scalar_lea.hbm %s11, %s1331
          %s1333 = sshll.u32 %s1288, 4
          %s1334 = int_to_ptr.vmem [resolvable:$true] %s1333
          %1339 = dma.vmem_to_hbm [thread:$0]  %s1334, 256, %s1332, %s1285, 64, 64, 4
        $region68: #{tpu_custom_call.1} parent=55 // pred_fallthru
          _
      $region56: #{tpu_custom_call.1} parent=5 // pred_fallthru
        _
      %p1340 = scmp.le.s32.totalorder 2, %s24
      // Predicated region
      $region69: #{tpu_custom_call.1} parent=5 // pred_check
        %p1341 = pneg %p1340
      $region70: #{tpu_custom_call.1} parent=5 // pred_check_branch
        %1343 = sbr.rel (%p1341) target = $region72
      $region71: #{tpu_custom_call.1} parent=5 // pred_region
        %s1344 = ssub.s32 %s24, 2
        // Predicated region
        $region73: #{tpu_custom_call.1} parent=71 // pred_check
          %p1345 = pneg %p263
        $region74: #{tpu_custom_call.1} parent=71 // pred_check_branch
          %1347 = sbr.rel (%p1345) target = $region76
        $region75: #{tpu_custom_call.1} parent=71 // pred_region
          %s1348 = sand.u32 %s248, 1
          %s1349 = scalar_lea.sflag [#allocation3], %s1348
          %s1350 = sand.u32 %s248, 1
          %s1351 = smul.addr %s1350, 16
          %s1352 = scalar_lea.vmem [#allocation2], %s1351
          %1353 = dma.done %s1349, 256
        $region76: #{tpu_custom_call.1} parent=71 // pred_fallthru
          _
        // Predicated region
        $region77: #{tpu_custom_call.1} parent=71 // pred_check
          %p1354 = pneg %p291
        $region78: #{tpu_custom_call.1} parent=71 // pred_check_branch
          %1356 = sbr.rel (%p1354) target = $region80
        $region79: #{tpu_custom_call.1} parent=71 // pred_region
          %s1357 = sand.u32 %s30, 1
          %s1358 = scalar_lea.sflag [#allocation5], %s1357
          %s1359 = sand.u32 %s276, 1
          %s1360 = smul.addr %s1359, 16
          %s1361 = scalar_lea.vmem [#allocation4], %s1360
          %1362 = dma.done %s1358, 256
        $region80: #{tpu_custom_call.1} parent=71 // pred_fallthru
          _
        // Predicated region
        $region81: #{tpu_custom_call.1} parent=71 // pred_check
          %p1363 = pneg %p319
        $region82: #{tpu_custom_call.1} parent=71 // pred_check_branch
          %1365 = sbr.rel (%p1363) target = $region84
        $region83: #{tpu_custom_call.1} parent=71 // pred_region
          %s1366 = sand.u32 %s30, 1
          %s1367 = scalar_lea.sflag [#allocation5], %s1366
          %s1368 = sand.u32 %s304, 1
          %s1369 = smul.addr %s1368, 16
          %s1370 = scalar_lea.vmem [#allocation6], %s1369
          %1371 = dma.done %s1367, 256
        $region84: #{tpu_custom_call.1} parent=71 // pred_fallthru
          _
      $region72: #{tpu_custom_call.1} parent=5 // pred_fallthru
        _
    $region6: #{tpu_custom_call.1} parent=1 // loop_footer
      %s28 = sadd.s32 1, %s24
    $region7: #{tpu_custom_call.1} parent=1 // loop_footer_branch
      %23 = sbr.rel target = $region3
    $region8: #{tpu_custom_call.1} parent=1 // loop_exit
      _
    %1372 = vsyncpa [#allocation3], 1
    %s1373 = scalar_lea.sflag [#allocation3], 1
    %1374 = vsyncpa %s1373, 1
    %1375 = vsyncpa [#allocation5], 1
    %s1376 = scalar_lea.sflag [#allocation5], 1
    %1377 = vsyncpa %s1376, 1

</llo_original>
